<compile_context>
chip_gen: v5e
topology: v5e:2x2
jax: 0.10.0
libtpu: 0.0.40
codegen_flags: <defaults>
</compile_context>

<pallas_src>
import jax
import jax.numpy as jnp
import numpy as np
from jax.experimental import pallas as pl
from jax.experimental.pallas import tpu as pltpu

# ----------------------------- problem sizes --------------------------------
SB, VB = 8, 4          # bond_dims  (n_scalar, n_vector)
SN, VN = 8, 4          # node_dims
SI, VI = 8, 4          # inter_dims
SO, VO = SB, VB        # out_dims (defaults to bond_dims)
E = 512                # number of edges (bonds)
N = 128                # number of nodes
TE = 128               # edge tile on the 128-lane axis
P = 8                  # vector channels padded to one full sublane tile
C_IN = SB + 3 * P      # 32 rows: [scalar(8) ; vx(8) ; vy(8) ; vz(8)]
C_OUT = SO + 3 * P     # 32 rows of the coalesced output slab
W_COLS = 32            # column width of the packed weight slab
FUSE_TYPE = "cross"    # 'cross' or 'concat'
EPS = 1e-5             # _norm_no_nan clamp


# ------------------------- wrapper-side weight prep --------------------------
def _pad_to(w, rows, cols):
    out = jnp.zeros((rows, cols), jnp.float32)
    return out.at[: w.shape[0], : w.shape[1]].set(w)


def _kron_i3(w):
    """block_diag(w, w, w): one matmul handles all three xyz components."""
    return jnp.kron(jnp.eye(3, dtype=jnp.float32), w)


class _WeightPacker:
    """Packs every pre-padded weight into one [R, W_COLS] f32 slab.
    One constant-index-map input instead of 24 pipelined weight tensors; the
    kernel slices it with static offsets (all row offsets are multiples of 8)."""

    def __init__(self, cols):
        self.cols = cols
        self.blocks = []
        self.meta = []      # (row_offset, rows, cols) per logical weight
        self.rows = 0

    def add(self, w):
        w = jnp.asarray(w, jnp.float32)
        r, c = w.shape
        r8 = ((r + 7) // 8) * 8
        self.blocks.append(_pad_to(w, r8, self.cols))
        self.meta.append((self.rows, r, c))
        self.rows += r8
        return len(self.meta) - 1

    def pack(self):
        return jnp.concatenate(self.blocks, axis=0)


def _prep_gvp(packer, gvp_params, s_splits, v_splits):
    """Pad / split / block-diagonalize one GVP's weights for the kernel layout.
    s_splits / v_splits are the channel widths of the scalar / vector input
    pieces in PyTorch concat order; splitting ws / wh column-wise removes every
    concat from the kernel."""
    Wh, Wv, Ws, b_s, Wsv, b_sv = gvp_params
    h = Wh.shape[0]
    assert Ws.shape[0] == 8 and Ws.shape[1] == sum(s_splits) + h
    assert Wh.shape[1] == sum(v_splits)

    wh_slots, col = [], 0
    for width in v_splits:                       # wh piece per vector-input group
        wh_slots.append(packer.add(_kron_i3(_pad_to(Wh[:, col:col + width], P, P))))
        col += width

    ws_s_slots, col = [], 0
    for width in s_splits:                       # ws columns for each scalar piece
        ws_s_slots.append(packer.add(_pad_to(Ws[:, col:col + width], 8, P)))
        col += width
    ws_vn = packer.add(_pad_to(Ws[:, col:col + h], 8, P))   # ws columns for vn

    return dict(
        wh=tuple(wh_slots),
        ws_s=tuple(ws_s_slots),
        ws_vn=ws_vn,
        bs=packer.add(b_s.reshape(-1, 1)),                   # [8, 1]
        wv3=packer.add(_kron_i3(_pad_to(Wv, P, P))),          # [24, 24]
        wsv=packer.add(_pad_to(Wsv, P, 8)),                   # [8, 8]
        bsv=packer.add(_pad_to(b_sv.reshape(-1, 1), P, 1)),   # [8, 1]
    )


def _prepare_weights(params):
    packer = _WeightPacker(W_COLS)
    slots = {
        "bond":  _prep_gvp(packer, params[0:6],   s_splits=(SB,),    v_splits=(VB,)),
        "node":  _prep_gvp(packer, params[6:12],  s_splits=(SN,),    v_splits=(VN,)),
        # inter GVP consumes the Fuser output: scalar = [s_l*s_r (SI) ; dot (VI)],
        # vector = [avg (VI) ; cross (VI)]  (torch.cat channel order)
        "inter": _prep_gvp(packer, params[12:18], s_splits=(SI, VI), v_splits=(VI, VI)),
        "out":   _prep_gvp(packer, params[18:24], s_splits=(SI,),    v_splits=(VI,)),
    }
    return packer.pack(), tuple(packer.meta), slots


def _pack_features(s, v):
    """[M, S] scalars + [M, V, 3] vectors -> channel-major [S + 3P, M] slab."""
    m = s.shape[0]
    s_cm = jnp.transpose(s)                                       # [S, M]
    v_cm = jnp.transpose(v, (2, 1, 0))                            # [3, V, M]
    v_cm = jnp.pad(v_cm, ((0, 0), (0, P - v.shape[1]), (0, 0)))   # [3, P, M]
    return jnp.concatenate([s_cm, v_cm.reshape(3 * P, m)], axis=0).astype(jnp.float32)


# ------------------------------- Pallas kernel --------------------------------
def _make_kernel(meta, slots):
    def get(w_ref, k):
        off, r, c = meta[k]
        return w_ref[off:off + r, 0:c]

    def gvp(w_ref, s_parts, v_parts, mod, relu_scalar):
        """GVP / GVLinear (vi>0, vo>0, vector_gate=True) on channel-major tiles.
        s_parts: scalar pieces, each [8, TE]; v_parts: vector pieces, each [3P, TE]."""
        vh = None                                   # wh (xyz fused via kron(I3, W))
        for piece, k in zip(v_parts, mod["wh"]):
            t = jnp.dot(get(w_ref, k), piece, preferred_element_type=jnp.float32)
            vh = t if vh is None else vh + t        # [3P, TE]
        vhx, vhy, vhz = vh[0:P], vh[P:2 * P], vh[2 * P:3 * P]
        # _norm_no_nan over xyz: sqrt(clamp(sum_sq, min=eps))
        vn = jnp.sqrt(jnp.maximum(vhx * vhx + vhy * vhy + vhz * vhz, EPS))

        s = get(w_ref, mod["bs"])                   # [8, 1] bias, broadcasts on lanes
        for piece, k in zip(s_parts, mod["ws_s"]):  # ws split per scalar piece
            s = s + jnp.dot(get(w_ref, k), piece, preferred_element_type=jnp.float32)
        s = s + jnp.dot(get(w_ref, mod["ws_vn"]), vn, preferred_element_type=jnp.float32)

        ov = jnp.dot(get(w_ref, mod["wv3"]), vh, preferred_element_type=jnp.float32)
        # vector gate (matches spec): gate = wsv(sigmoid(s)); v *= sigmoid(gate)
        gate = get(w_ref, mod["bsv"]) + jnp.dot(
            get(w_ref, mod["wsv"]), jax.nn.sigmoid(s), preferred_element_type=jnp.float32)
        g = jax.nn.sigmoid(gate)                    # [8, TE]
        ov = ov * jnp.concatenate([g, g, g], axis=0)
        if relu_scalar:                             # scalar_act applied last
            s = jnp.maximum(s, 0.0)
        return s, ov

    def kernel(w_ref, bond_ref, node_ref, out_ref):
        b_s_in = bond_ref[0:SB, :]
        b_v_in = bond_ref[SB:SB + 3 * P, :]
        n_s_in = node_ref[0:SN, :]
        n_v_in = node_ref[SN:SN + 3 * P, :]

        b_s, b_v = gvp(w_ref, (b_s_in,), (b_v_in,), slots["bond"], relu_scalar=False)
        n_s, n_v = gvp(w_ref, (n_s_in,), (n_v_in,), slots["node"], relu_scalar=False)

        # ------------------------------ Fuser -------------------------------
        bx, by, bz = b_v[0:P], b_v[P:2 * P], b_v[2 * P:3 * P]
        nx, ny, nz = n_v[0:P], n_v[P:2 * P], n_v[2 * P:3 * P]
        s_mul = b_s * n_s                                     # [8, TE]
        dotp = bx * nx + by * ny + bz * nz                    # [8, TE] (padded rows 0)
        if FUSE_TYPE == "cross":
            v_a = (b_v + n_v) * 0.5
            v_b = jnp.concatenate(
                [by * nz - bz * ny, bz * nx - bx * nz, bx * ny - by * nx], axis=0)
        elif FUSE_TYPE == "concat":
            v_a, v_b = b_v, n_v
        else:
            raise NotImplementedError("Fuser type not implemented")

        i_s, i_v = gvp(w_ref, (s_mul, dotp), (v_a, v_b), slots["inter"], relu_scalar=True)
        o_s, o_v = gvp(w_ref, (i_s,), (i_v,), slots["out"], relu_scalar=False)

        # coalesced lane-dense output slab (full 128-lane unmasked stores)
        out_ref[0:SO, :] = o_s
        out_ref[SO:SO + 3 * P, :] = o_v

    return kernel


# -------------------------------- wrapper -------------------------------------
def bond_ffn_gvp(bond_s, bond_v, node_s, node_v, node_index, params):
    """bond_s [E,SB], bond_v [E,VB,3], node_s [N,SN], node_v [N,VN,3], node_index [E]."""
    n_edges = bond_s.shape[0]
    assert n_edges % TE == 0

    w_slab, meta, slots = _prepare_weights(params)
    bond_in = _pack_features(bond_s, bond_v)                              # [32, E]
    # glue: node -> edge gather (pointwise node_linear commutes with the gather)
    node_in = _pack_features(node_s[node_index], node_v[node_index])      # [32, E]

    out = pl.pallas_call(
        _make_kernel(meta, slots),
        grid=(n_edges // TE,),
        in_specs=[
            pl.BlockSpec((w_slab.shape[0], W_COLS), lambda i: (0, 0)),    # weight slab
            pl.BlockSpec((C_IN, TE), lambda i: (0, i)),                   # bond slab
            pl.BlockSpec((C_IN, TE), lambda i: (0, i)),                   # node slab
        ],
        out_specs=pl.BlockSpec((C_OUT, TE), lambda i: (0, i)),
        out_shape=jax.ShapeDtypeStruct((C_OUT, n_edges), jnp.float32),
        compiler_params=pltpu.CompilerParams(dimension_semantics=("parallel",)),
    )(w_slab, bond_in, node_in)

    out_s = jnp.transpose(out[0:SO, :])                                   # [E, SO]
    out_v = out[SO:SO + 3 * P, :].reshape(3, P, n_edges)[:, :VO, :]       # [3, VO, E]
    return out_s, jnp.transpose(out_v, (2, 1, 0))                         # [E, VO, 3]


# --------------------------- reference (plain JAX) -----------------------------
def _ref_gvp(s, v, gvp_params, relu_scalar):
    Wh, Wv, Ws, b_s, Wsv, b_sv = gvp_params
    hp = jax.lax.Precision.HIGHEST
    vt = jnp.swapaxes(v, -1, -2)                                          # [E, 3, vi]
    vh = jnp.dot(vt, Wh.T, precision=hp)                                  # [E, 3, h]
    vn = jnp.sqrt(jnp.maximum(jnp.sum(vh * vh, axis=-2), EPS))            # [E, h]
    s_out = jnp.dot(jnp.concatenate([s, vn], -1), Ws.T, precision=hp) + b_s
    v_out = jnp.swapaxes(jnp.dot(vh, Wv.T, precision=hp), -1, -2)         # [E, vo, 3]
    gate = jnp.dot(jax.nn.sigmoid(s_out), Wsv.T, precision=hp) + b_sv
    v_out = v_out * jax.nn.sigmoid(gate)[..., None]
    if relu_scalar:
        s_out = jax.nn.relu(s_out)
    return s_out, v_out


def reference(bond_s, bond_v, node_s, node_v, node_index, params):
    b_s, b_v = _ref_gvp(bond_s, bond_v, params[0:6], relu_scalar=False)
    n_s, n_v = _ref_gvp(node_s, node_v, params[6:12], relu_scalar=False)
    n_s, n_v = n_s[node_index], n_v[node_index]          # Fuser right_index
    scalar = jnp.concatenate([b_s * n_s, jnp.sum(b_v * n_v, axis=-1)], axis=-1)
    if FUSE_TYPE == "cross":
        vector = jnp.concatenate([(b_v + n_v) / 2, jnp.cross(b_v, n_v, axis=-1)], axis=-2)
    elif FUSE_TYPE == "concat":
        vector = jnp.concatenate([b_v, n_v], axis=-2)
    else:
        raise NotImplementedError
    i_s, i_v = _ref_gvp(scalar, vector, params[12:18], relu_scalar=True)
    return _ref_gvp(i_s, i_v, params[18:24], relu_scalar=False)


# ------------------------------ parameter init ---------------------------------
def _gvp_param_shapes(si, vi, so, vo):
    h = max(vi, vo)
    # Wh [h,vi] (no bias), Wv [vo,h] (no bias), Ws [so, si+h] + b, Wsv [vo,so] + b
    return [(h, vi), (vo, h), (so, si + h), (so,), (vo, so), (vo,)]


def init_params(key):
    shapes = (
        _gvp_param_shapes(SB, VB, SI, VI)             # bond_linear  (GVLinear)
        + _gvp_param_shapes(SN, VN, SI, VI)           # node_linear  (GVLinear)
        + _gvp_param_shapes(SI + VI, 2 * VI, SI, VI)  # inter GVP (fuser dims in)
        + _gvp_param_shapes(SI, VI, SO, VO)           # out GVLinear
    )
    keys = jax.random.split(key, len(shapes))
    return [0.3 * jax.random.normal(k, s, jnp.float32) for k, s in zip(keys, shapes)]


# ----------------------------------- main ---------------------------------------
if __name__ == "__main__":
    root = jax.random.PRNGKey(0)
    k_bs, k_bv, k_ns, k_nv, k_idx, k_par = jax.random.split(root, 6)

    bond_s = jax.random.normal(k_bs, (E, SB), jnp.float32)
    bond_v = jax.random.normal(k_bv, (E, VB, 3), jnp.float32)
    node_s = jax.random.normal(k_ns, (N, SN), jnp.float32)
    node_v = jax.random.normal(k_nv, (N, VN, 3), jnp.float32)
    node_index = jax.random.randint(k_idx, (E,), 0, N, dtype=jnp.int32)
    params = init_params(k_par)

    out_s, out_v = jax.jit(bond_ffn_gvp)(bond_s, bond_v, node_s, node_v,
                                         node_index, params)
    out_s = jax.block_until_ready(out_s)
    out_v = jax.block_until_ready(out_v)

    ref_s, ref_v = reference(bond_s, bond_v, node_s, node_v, node_index, params)
    assert np.allclose(np.asarray(out_s), np.asarray(ref_s), atol=5e-3, rtol=5e-3)
    assert np.allclose(np.asarray(out_v), np.asarray(ref_v), atol=5e-3, rtol=5e-3)

    print("KERNEL_OK")
</pallas_src>

<mosaic_0001>
module attributes {stable_mosaic.version = 11 : i64} {
  func.func @kernel(%arg0: i32, %arg1: memref<384x32xf32, #tpu.memory_space<vmem>>, %arg2: memref<32x128xf32, #tpu.memory_space<vmem>>, %arg3: memref<32x128xf32, #tpu.memory_space<vmem>>, %arg4: memref<32x128xf32, #tpu.memory_space<vmem>>) attributes {dimension_semantics = [#tpu.dimension_semantics<parallel>], iteration_bounds = array<i64: 4>, scalar_prefetch = 0 : i64, scratch_operands = 0 : i64, tpu.core_type = #tpu.core_type<tc>, window_params = [{pipeline_mode = #tpu.pipeline_mode<synchronous>, transform_indices = @transform_0, window_bounds = array<i64: 384, 32>}, {transform_indices = @transform_1, window_bounds = array<i64: 32, 128>}, {transform_indices = @transform_2, window_bounds = array<i64: 32, 128>}, {transform_indices = @transform_3, window_bounds = array<i64: 32, 128>}]} {
    %c0 = arith.constant 0 : index
    %c0_0 = arith.constant 0 : index
    %0 = vector.load %arg2[%c0, %c0_0] : memref<32x128xf32, #tpu.memory_space<vmem>>, vector<8x128xf32>
    %c8 = arith.constant 8 : index
    %c0_1 = arith.constant 0 : index
    %1 = vector.load %arg2[%c8, %c0_1] : memref<32x128xf32, #tpu.memory_space<vmem>>, vector<24x128xf32>
    %c0_2 = arith.constant 0 : index
    %c0_3 = arith.constant 0 : index
    %2 = vector.load %arg3[%c0_2, %c0_3] : memref<32x128xf32, #tpu.memory_space<vmem>>, vector<8x128xf32>
    %c8_4 = arith.constant 8 : index
    %c0_5 = arith.constant 0 : index
    %3 = vector.load %arg3[%c8_4, %c0_5] : memref<32x128xf32, #tpu.memory_space<vmem>>, vector<24x128xf32>
    %c0_6 = arith.constant 0 : index
    %c0_7 = arith.constant 0 : index
    %4 = vector.load %arg1[%c0_6, %c0_7] : memref<384x32xf32, #tpu.memory_space<vmem>>, vector<24x24xf32>
    %cst = arith.constant dense<0.000000e+00> : vector<24x128xf32>
    %5 = tpu.matmul %4, %1, %cst {dimension_numbers = #tpu.dot_dimension_numbers<[1], [0], [0], [1], [0, 0, 1, 1], [], []>} : vector<24x24xf32>, vector<24x128xf32>, vector<24x128xf32> -> vector<24x128xf32>
    %6 = vector.extract_strided_slice %5 {offsets = [0, 0], sizes = [8, 128], strides = [1, 1]} : vector<24x128xf32> to vector<8x128xf32>
    %7 = vector.extract_strided_slice %5 {offsets = [8, 0], sizes = [8, 128], strides = [1, 1]} : vector<24x128xf32> to vector<8x128xf32>
    %8 = vector.extract_strided_slice %5 {offsets = [16, 0], sizes = [8, 128], strides = [1, 1]} : vector<24x128xf32> to vector<8x128xf32>
    %9 = arith.mulf %6, %6 : vector<8x128xf32>
    %10 = arith.mulf %7, %7 : vector<8x128xf32>
    %11 = arith.addf %9, %10 : vector<8x128xf32>
    %12 = arith.mulf %8, %8 : vector<8x128xf32>
    %13 = arith.addf %11, %12 : vector<8x128xf32>
    %cst_8 = arith.constant 9.99999974E-6 : f32
    %14 = vector.broadcast %cst_8 : f32 to vector<8x128xf32>
    %15 = arith.maximumf %13, %14 : vector<8x128xf32>
    %16 = math.sqrt %15 : vector<8x128xf32>
    %c40 = arith.constant 40 : index
    %c0_9 = arith.constant 0 : index
    %17 = vector.load %arg1[%c40, %c0_9] : memref<384x32xf32, #tpu.memory_space<vmem>>, vector<8x1xf32>
    %c24 = arith.constant 24 : index
    %c0_10 = arith.constant 0 : index
    %18 = vector.load %arg1[%c24, %c0_10] : memref<384x32xf32, #tpu.memory_space<vmem>>, vector<8x8xf32>
    %cst_11 = arith.constant dense<0.000000e+00> : vector<8x128xf32>
    %19 = tpu.matmul %18, %0, %cst_11 {dimension_numbers = #tpu.dot_dimension_numbers<[1], [0], [0], [1], [0, 0, 1, 1], [], []>} : vector<8x8xf32>, vector<8x128xf32>, vector<8x128xf32> -> vector<8x128xf32>
    %20 = vector.broadcast %17 : vector<8x1xf32> to vector<8x128xf32>
    %21 = arith.addf %20, %19 : vector<8x128xf32>
    %c32 = arith.constant 32 : index
    %c0_12 = arith.constant 0 : index
    %22 = vector.load %arg1[%c32, %c0_12] : memref<384x32xf32, #tpu.memory_space<vmem>>, vector<8x8xf32>
    %cst_13 = arith.constant dense<0.000000e+00> : vector<8x128xf32>
    %23 = tpu.matmul %22, %16, %cst_13 {dimension_numbers = #tpu.dot_dimension_numbers<[1], [0], [0], [1], [0, 0, 1, 1], [], []>} : vector<8x8xf32>, vector<8x128xf32>, vector<8x128xf32> -> vector<8x128xf32>
    %24 = arith.addf %21, %23 : vector<8x128xf32>
    %c48 = arith.constant 48 : index
    %c0_14 = arith.constant 0 : index
    %25 = vector.load %arg1[%c48, %c0_14] : memref<384x32xf32, #tpu.memory_space<vmem>>, vector<24x24xf32>
    %cst_15 = arith.constant dense<0.000000e+00> : vector<24x128xf32>
    %26 = tpu.matmul %25, %5, %cst_15 {dimension_numbers = #tpu.dot_dimension_numbers<[1], [0], [0], [1], [0, 0, 1, 1], [], []>} : vector<24x24xf32>, vector<24x128xf32>, vector<24x128xf32> -> vector<24x128xf32>
    %c80 = arith.constant 80 : index
    %c0_16 = arith.constant 0 : index
    %27 = vector.load %arg1[%c80, %c0_16] : memref<384x32xf32, #tpu.memory_space<vmem>>, vector<8x1xf32>
    %c72 = arith.constant 72 : index
    %c0_17 = arith.constant 0 : index
    %28 = vector.load %arg1[%c72, %c0_17] : memref<384x32xf32, #tpu.memory_space<vmem>>, vector<8x8xf32>
    %29 = arith.negf %24 : vector<8x128xf32>
    %30 = math.exp %29 : vector<8x128xf32>
    %cst_18 = arith.constant 1.000000e+00 : f32
    %31 = vector.broadcast %cst_18 : f32 to vector<8x128xf32>
    %32 = arith.addf %31, %30 : vector<8x128xf32>
    %33 = arith.divf %31, %32 : vector<8x128xf32>
    %cst_19 = arith.constant dense<0.000000e+00> : vector<8x128xf32>
    %34 = tpu.matmul %28, %33, %cst_19 {dimension_numbers = #tpu.dot_dimension_numbers<[1], [0], [0], [1], [0, 0, 1, 1], [], []>} : vector<8x8xf32>, vector<8x128xf32>, vector<8x128xf32> -> vector<8x128xf32>
    %35 = vector.broadcast %27 : vector<8x1xf32> to vector<8x128xf32>
    %36 = arith.addf %35, %34 : vector<8x128xf32>
    %37 = arith.negf %36 : vector<8x128xf32>
    %38 = math.exp %37 : vector<8x128xf32>
    %cst_20 = arith.constant 1.000000e+00 : f32
    %39 = vector.broadcast %cst_20 : f32 to vector<8x128xf32>
    %40 = arith.addf %39, %38 : vector<8x128xf32>
    %41 = arith.divf %39, %40 : vector<8x128xf32>
    %42 = tpu.concatenate %41, %41, %41 in 0 : vector<8x128xf32>, vector<8x128xf32>, vector<8x128xf32> -> vector<24x128xf32>
    %43 = arith.mulf %26, %42 : vector<24x128xf32>
    %c88 = arith.constant 88 : index
    %c0_21 = arith.constant 0 : index
    %44 = vector.load %arg1[%c88, %c0_21] : memref<384x32xf32, #tpu.memory_space<vmem>>, vector<24x24xf32>
    %cst_22 = arith.constant dense<0.000000e+00> : vector<24x128xf32>
    %45 = tpu.matmul %44, %3, %cst_22 {dimension_numbers = #tpu.dot_dimension_numbers<[1], [0], [0], [1], [0, 0, 1, 1], [], []>} : vector<24x24xf32>, vector<24x128xf32>, vector<24x128xf32> -> vector<24x128xf32>
    %46 = vector.extract_strided_slice %45 {offsets = [0, 0], sizes = [8, 128], strides = [1, 1]} : vector<24x128xf32> to vector<8x128xf32>
    %47 = vector.extract_strided_slice %45 {offsets = [8, 0], sizes = [8, 128], strides = [1, 1]} : vector<24x128xf32> to vector<8x128xf32>
    %48 = vector.extract_strided_slice %45 {offsets = [16, 0], sizes = [8, 128], strides = [1, 1]} : vector<24x128xf32> to vector<8x128xf32>
    %49 = arith.mulf %46, %46 : vector<8x128xf32>
    %50 = arith.mulf %47, %47 : vector<8x128xf32>
    %51 = arith.addf %49, %50 : vector<8x128xf32>
    %52 = arith.mulf %48, %48 : vector<8x128xf32>
    %53 = arith.addf %51, %52 : vector<8x128xf32>
    %cst_23 = arith.constant 9.99999974E-6 : f32
    %54 = vector.broadcast %cst_23 : f32 to vector<8x128xf32>
    %55 = arith.maximumf %53, %54 : vector<8x128xf32>
    %56 = math.sqrt %55 : vector<8x128xf32>
    %c128 = arith.constant 128 : index
    %c0_24 = arith.constant 0 : index
    %57 = vector.load %arg1[%c128, %c0_24] : memref<384x32xf32, #tpu.memory_space<vmem>>, vector<8x1xf32>
    %c112 = arith.constant 112 : index
    %c0_25 = arith.constant 0 : index
    %58 = vector.load %arg1[%c112, %c0_25] : memref<384x32xf32, #tpu.memory_space<vmem>>, vector<8x8xf32>
    %cst_26 = arith.constant dense<0.000000e+00> : vector<8x128xf32>
    %59 = tpu.matmul %58, %2, %cst_26 {dimension_numbers = #tpu.dot_dimension_numbers<[1], [0], [0], [1], [0, 0, 1, 1], [], []>} : vector<8x8xf32>, vector<8x128xf32>, vector<8x128xf32> -> vector<8x128xf32>
    %60 = vector.broadcast %57 : vector<8x1xf32> to vector<8x128xf32>
    %61 = arith.addf %60, %59 : vector<8x128xf32>
    %c120 = arith.constant 120 : index
    %c0_27 = arith.constant 0 : index
    %62 = vector.load %arg1[%c120, %c0_27] : memref<384x32xf32, #tpu.memory_space<vmem>>, vector<8x8xf32>
    %cst_28 = arith.constant dense<0.000000e+00> : vector<8x128xf32>
    %63 = tpu.matmul %62, %56, %cst_28 {dimension_numbers = #tpu.dot_dimension_numbers<[1], [0], [0], [1], [0, 0, 1, 1], [], []>} : vector<8x8xf32>, vector<8x128xf32>, vector<8x128xf32> -> vector<8x128xf32>
    %64 = arith.addf %61, %63 : vector<8x128xf32>
    %c136 = arith.constant 136 : index
    %c0_29 = arith.constant 0 : index
    %65 = vector.load %arg1[%c136, %c0_29] : memref<384x32xf32, #tpu.memory_space<vmem>>, vector<24x24xf32>
    %cst_30 = arith.constant dense<0.000000e+00> : vector<24x128xf32>
    %66 = tpu.matmul %65, %45, %cst_30 {dimension_numbers = #tpu.dot_dimension_numbers<[1], [0], [0], [1], [0, 0, 1, 1], [], []>} : vector<24x24xf32>, vector<24x128xf32>, vector<24x128xf32> -> vector<24x128xf32>
    %c168 = arith.constant 168 : index
    %c0_31 = arith.constant 0 : index
    %67 = vector.load %arg1[%c168, %c0_31] : memref<384x32xf32, #tpu.memory_space<vmem>>, vector<8x1xf32>
    %c160 = arith.constant 160 : index
    %c0_32 = arith.constant 0 : index
    %68 = vector.load %arg1[%c160, %c0_32] : memref<384x32xf32, #tpu.memory_space<vmem>>, vector<8x8xf32>
    %69 = arith.negf %64 : vector<8x128xf32>
    %70 = math.exp %69 : vector<8x128xf32>
    %cst_33 = arith.constant 1.000000e+00 : f32
    %71 = vector.broadcast %cst_33 : f32 to vector<8x128xf32>
    %72 = arith.addf %71, %70 : vector<8x128xf32>
    %73 = arith.divf %71, %72 : vector<8x128xf32>
    %cst_34 = arith.constant dense<0.000000e+00> : vector<8x128xf32>
    %74 = tpu.matmul %68, %73, %cst_34 {dimension_numbers = #tpu.dot_dimension_numbers<[1], [0], [0], [1], [0, 0, 1, 1], [], []>} : vector<8x8xf32>, vector<8x128xf32>, vector<8x128xf32> -> vector<8x128xf32>
    %75 = vector.broadcast %67 : vector<8x1xf32> to vector<8x128xf32>
    %76 = arith.addf %75, %74 : vector<8x128xf32>
    %77 = arith.negf %76 : vector<8x128xf32>
    %78 = math.exp %77 : vector<8x128xf32>
    %cst_35 = arith.constant 1.000000e+00 : f32
    %79 = vector.broadcast %cst_35 : f32 to vector<8x128xf32>
    %80 = arith.addf %79, %78 : vector<8x128xf32>
    %81 = arith.divf %79, %80 : vector<8x128xf32>
    %82 = tpu.concatenate %81, %81, %81 in 0 : vector<8x128xf32>, vector<8x128xf32>, vector<8x128xf32> -> vector<24x128xf32>
    %83 = arith.mulf %66, %82 : vector<24x128xf32>
    %84 = vector.extract_strided_slice %43 {offsets = [0, 0], sizes = [8, 128], strides = [1, 1]} : vector<24x128xf32> to vector<8x128xf32>
    %85 = vector.extract_strided_slice %43 {offsets = [8, 0], sizes = [8, 128], strides = [1, 1]} : vector<24x128xf32> to vector<8x128xf32>
    %86 = vector.extract_strided_slice %43 {offsets = [16, 0], sizes = [8, 128], strides = [1, 1]} : vector<24x128xf32> to vector<8x128xf32>
    %87 = vector.extract_strided_slice %83 {offsets = [0, 0], sizes = [8, 128], strides = [1, 1]} : vector<24x128xf32> to vector<8x128xf32>
    %88 = vector.extract_strided_slice %83 {offsets = [8, 0], sizes = [8, 128], strides = [1, 1]} : vector<24x128xf32> to vector<8x128xf32>
    %89 = vector.extract_strided_slice %83 {offsets = [16, 0], sizes = [8, 128], strides = [1, 1]} : vector<24x128xf32> to vector<8x128xf32>
    %90 = arith.mulf %24, %64 : vector<8x128xf32>
    %91 = arith.mulf %84, %87 : vector<8x128xf32>
    %92 = arith.mulf %85, %88 : vector<8x128xf32>
    %93 = arith.addf %91, %92 : vector<8x128xf32>
    %94 = arith.mulf %86, %89 : vector<8x128xf32>
    %95 = arith.addf %93, %94 : vector<8x128xf32>
    %96 = arith.addf %43, %83 : vector<24x128xf32>
    %cst_36 = arith.constant 5.000000e-01 : f32
    %97 = vector.broadcast %cst_36 : f32 to vector<24x128xf32>
    %98 = arith.mulf %96, %97 : vector<24x128xf32>
    %99 = arith.mulf %85, %89 : vector<8x128xf32>
    %100 = arith.mulf %86, %88 : vector<8x128xf32>
    %101 = arith.subf %99, %100 : vector<8x128xf32>
    %102 = arith.mulf %86, %87 : vector<8x128xf32>
    %103 = arith.mulf %84, %89 : vector<8x128xf32>
    %104 = arith.subf %102, %103 : vector<8x128xf32>
    %105 = arith.mulf %84, %88 : vector<8x128xf32>
    %106 = arith.mulf %85, %87 : vector<8x128xf32>
    %107 = arith.subf %105, %106 : vector<8x128xf32>
    %108 = tpu.concatenate %101, %104, %107 in 0 : vector<8x128xf32>, vector<8x128xf32>, vector<8x128xf32> -> vector<24x128xf32>
    %c176 = arith.constant 176 : index
    %c0_37 = arith.constant 0 : index
    %109 = vector.load %arg1[%c176, %c0_37] : memref<384x32xf32, #tpu.memory_space<vmem>>, vector<24x24xf32>
    %cst_38 = arith.constant dense<0.000000e+00> : vector<24x128xf32>
    %110 = tpu.matmul %109, %98, %cst_38 {dimension_numbers = #tpu.dot_dimension_numbers<[1], [0], [0], [1], [0, 0, 1, 1], [], []>} : vector<24x24xf32>, vector<24x128xf32>, vector<24x128xf32> -> vector<24x128xf32>
    %c200 = arith.constant 200 : index
    %c0_39 = arith.constant 0 : index
    %111 = vector.load %arg1[%c200, %c0_39] : memref<384x32xf32, #tpu.memory_space<vmem>>, vector<24x24xf32>
    %cst_40 = arith.constant dense<0.000000e+00> : vector<24x128xf32>
    %112 = tpu.matmul %111, %108, %cst_40 {dimension_numbers = #tpu.dot_dimension_numbers<[1], [0], [0], [1], [0, 0, 1, 1], [], []>} : vector<24x24xf32>, vector<24x128xf32>, vector<24x128xf32> -> vector<24x128xf32>
    %113 = arith.addf %110, %112 : vector<24x128xf32>
    %114 = vector.extract_strided_slice %113 {offsets = [0, 0], sizes = [8, 128], strides = [1, 1]} : vector<24x128xf32> to vector<8x128xf32>
    %115 = vector.extract_strided_slice %113 {offsets = [8, 0], sizes = [8, 128], strides = [1, 1]} : vector<24x128xf32> to vector<8x128xf32>
    %116 = vector.extract_strided_slice %113 {offsets = [16, 0], sizes = [8, 128], strides = [1, 1]} : vector<24x128xf32> to vector<8x128xf32>
    %117 = arith.mulf %114, %114 : vector<8x128xf32>
    %118 = arith.mulf %115, %115 : vector<8x128xf32>
    %119 = arith.addf %117, %118 : vector<8x128xf32>
    %120 = arith.mulf %116, %116 : vector<8x128xf32>
    %121 = arith.addf %119, %120 : vector<8x128xf32>
    %cst_41 = arith.constant 9.99999974E-6 : f32
    %122 = vector.broadcast %cst_41 : f32 to vector<8x128xf32>
    %123 = arith.maximumf %121, %122 : vector<8x128xf32>
    %124 = math.sqrt %123 : vector<8x128xf32>
    %c248 = arith.constant 248 : index
    %c0_42 = arith.constant 0 : index
    %125 = vector.load %arg1[%c248, %c0_42] : memref<384x32xf32, #tpu.memory_space<vmem>>, vector<8x1xf32>
    %c224 = arith.constant 224 : index
    %c0_43 = arith.constant 0 : index
    %126 = vector.load %arg1[%c224, %c0_43] : memref<384x32xf32, #tpu.memory_space<vmem>>, vector<8x8xf32>
    %cst_44 = arith.constant dense<0.000000e+00> : vector<8x128xf32>
    %127 = tpu.matmul %126, %90, %cst_44 {dimension_numbers = #tpu.dot_dimension_numbers<[1], [0], [0], [1], [0, 0, 1, 1], [], []>} : vector<8x8xf32>, vector<8x128xf32>, vector<8x128xf32> -> vector<8x128xf32>
    %128 = vector.broadcast %125 : vector<8x1xf32> to vector<8x128xf32>
    %129 = arith.addf %128, %127 : vector<8x128xf32>
    %c232 = arith.constant 232 : index
    %c0_45 = arith.constant 0 : index
    %130 = vector.load %arg1[%c232, %c0_45] : memref<384x32xf32, #tpu.memory_space<vmem>>, vector<8x8xf32>
    %cst_46 = arith.constant dense<0.000000e+00> : vector<8x128xf32>
    %131 = tpu.matmul %130, %95, %cst_46 {dimension_numbers = #tpu.dot_dimension_numbers<[1], [0], [0], [1], [0, 0, 1, 1], [], []>} : vector<8x8xf32>, vector<8x128xf32>, vector<8x128xf32> -> vector<8x128xf32>
    %132 = arith.addf %129, %131 : vector<8x128xf32>
    %c240 = arith.constant 240 : index
    %c0_47 = arith.constant 0 : index
    %133 = vector.load %arg1[%c240, %c0_47] : memref<384x32xf32, #tpu.memory_space<vmem>>, vector<8x8xf32>
    %cst_48 = arith.constant dense<0.000000e+00> : vector<8x128xf32>
    %134 = tpu.matmul %133, %124, %cst_48 {dimension_numbers = #tpu.dot_dimension_numbers<[1], [0], [0], [1], [0, 0, 1, 1], [], []>} : vector<8x8xf32>, vector<8x128xf32>, vector<8x128xf32> -> vector<8x128xf32>
    %135 = arith.addf %132, %134 : vector<8x128xf32>
    %c256 = arith.constant 256 : index
    %c0_49 = arith.constant 0 : index
    %136 = vector.load %arg1[%c256, %c0_49] : memref<384x32xf32, #tpu.memory_space<vmem>>, vector<24x24xf32>
    %cst_50 = arith.constant dense<0.000000e+00> : vector<24x128xf32>
    %137 = tpu.matmul %136, %113, %cst_50 {dimension_numbers = #tpu.dot_dimension_numbers<[1], [0], [0], [1], [0, 0, 1, 1], [], []>} : vector<24x24xf32>, vector<24x128xf32>, vector<24x128xf32> -> vector<24x128xf32>
    %c288 = arith.constant 288 : index
    %c0_51 = arith.constant 0 : index
    %138 = vector.load %arg1[%c288, %c0_51] : memref<384x32xf32, #tpu.memory_space<vmem>>, vector<8x1xf32>
    %c280 = arith.constant 280 : index
    %c0_52 = arith.constant 0 : index
    %139 = vector.load %arg1[%c280, %c0_52] : memref<384x32xf32, #tpu.memory_space<vmem>>, vector<8x8xf32>
    %140 = arith.negf %135 : vector<8x128xf32>
    %141 = math.exp %140 : vector<8x128xf32>
    %cst_53 = arith.constant 1.000000e+00 : f32
    %142 = vector.broadcast %cst_53 : f32 to vector<8x128xf32>
    %143 = arith.addf %142, %141 : vector<8x128xf32>
    %144 = arith.divf %142, %143 : vector<8x128xf32>
    %cst_54 = arith.constant dense<0.000000e+00> : vector<8x128xf32>
    %145 = tpu.matmul %139, %144, %cst_54 {dimension_numbers = #tpu.dot_dimension_numbers<[1], [0], [0], [1], [0, 0, 1, 1], [], []>} : vector<8x8xf32>, vector<8x128xf32>, vector<8x128xf32> -> vector<8x128xf32>
    %146 = vector.broadcast %138 : vector<8x1xf32> to vector<8x128xf32>
    %147 = arith.addf %146, %145 : vector<8x128xf32>
    %148 = arith.negf %147 : vector<8x128xf32>
    %149 = math.exp %148 : vector<8x128xf32>
    %cst_55 = arith.constant 1.000000e+00 : f32
    %150 = vector.broadcast %cst_55 : f32 to vector<8x128xf32>
    %151 = arith.addf %150, %149 : vector<8x128xf32>
    %152 = arith.divf %150, %151 : vector<8x128xf32>
    %153 = tpu.concatenate %152, %152, %152 in 0 : vector<8x128xf32>, vector<8x128xf32>, vector<8x128xf32> -> vector<24x128xf32>
    %154 = arith.mulf %137, %153 : vector<24x128xf32>
    %cst_56 = arith.constant 0.000000e+00 : f32
    %155 = vector.broadcast %cst_56 : f32 to vector<8x128xf32>
    %156 = arith.maximumf %135, %155 : vector<8x128xf32>
    %c296 = arith.constant 296 : index
    %c0_57 = arith.constant 0 : index
    %157 = vector.load %arg1[%c296, %c0_57] : memref<384x32xf32, #tpu.memory_space<vmem>>, vector<24x24xf32>
    %cst_58 = arith.constant dense<0.000000e+00> : vector<24x128xf32>
    %158 = tpu.matmul %157, %154, %cst_58 {dimension_numbers = #tpu.dot_dimension_numbers<[1], [0], [0], [1], [0, 0, 1, 1], [], []>} : vector<24x24xf32>, vector<24x128xf32>, vector<24x128xf32> -> vector<24x128xf32>
    %159 = vector.extract_strided_slice %158 {offsets = [0, 0], sizes = [8, 128], strides = [1, 1]} : vector<24x128xf32> to vector<8x128xf32>
    %160 = vector.extract_strided_slice %158 {offsets = [8, 0], sizes = [8, 128], strides = [1, 1]} : vector<24x128xf32> to vector<8x128xf32>
    %161 = vector.extract_strided_slice %158 {offsets = [16, 0], sizes = [8, 128], strides = [1, 1]} : vector<24x128xf32> to vector<8x128xf32>
    %162 = arith.mulf %159, %159 : vector<8x128xf32>
    %163 = arith.mulf %160, %160 : vector<8x128xf32>
    %164 = arith.addf %162, %163 : vector<8x128xf32>
    %165 = arith.mulf %161, %161 : vector<8x128xf32>
    %166 = arith.addf %164, %165 : vector<8x128xf32>
    %cst_59 = arith.constant 9.99999974E-6 : f32
    %167 = vector.broadcast %cst_59 : f32 to vector<8x128xf32>
    %168 = arith.maximumf %166, %167 : vector<8x128xf32>
    %169 = math.sqrt %168 : vector<8x128xf32>
    %c336 = arith.constant 336 : index
    %c0_60 = arith.constant 0 : index
    %170 = vector.load %arg1[%c336, %c0_60] : memref<384x32xf32, #tpu.memory_space<vmem>>, vector<8x1xf32>
    %c320 = arith.constant 320 : index
    %c0_61 = arith.constant 0 : index
    %171 = vector.load %arg1[%c320, %c0_61] : memref<384x32xf32, #tpu.memory_space<vmem>>, vector<8x8xf32>
    %cst_62 = arith.constant dense<0.000000e+00> : vector<8x128xf32>
    %172 = tpu.matmul %171, %156, %cst_62 {dimension_numbers = #tpu.dot_dimension_numbers<[1], [0], [0], [1], [0, 0, 1, 1], [], []>} : vector<8x8xf32>, vector<8x128xf32>, vector<8x128xf32> -> vector<8x128xf32>
    %173 = vector.broadcast %170 : vector<8x1xf32> to vector<8x128xf32>
    %174 = arith.addf %173, %172 : vector<8x128xf32>
    %c328 = arith.constant 328 : index
    %c0_63 = arith.constant 0 : index
    %175 = vector.load %arg1[%c328, %c0_63] : memref<384x32xf32, #tpu.memory_space<vmem>>, vector<8x8xf32>
    %cst_64 = arith.constant dense<0.000000e+00> : vector<8x128xf32>
    %176 = tpu.matmul %175, %169, %cst_64 {dimension_numbers = #tpu.dot_dimension_numbers<[1], [0], [0], [1], [0, 0, 1, 1], [], []>} : vector<8x8xf32>, vector<8x128xf32>, vector<8x128xf32> -> vector<8x128xf32>
    %177 = arith.addf %174, %176 : vector<8x128xf32>
    %c344 = arith.constant 344 : index
    %c0_65 = arith.constant 0 : index
    %178 = vector.load %arg1[%c344, %c0_65] : memref<384x32xf32, #tpu.memory_space<vmem>>, vector<24x24xf32>
    %cst_66 = arith.constant dense<0.000000e+00> : vector<24x128xf32>
    %179 = tpu.matmul %178, %158, %cst_66 {dimension_numbers = #tpu.dot_dimension_numbers<[1], [0], [0], [1], [0, 0, 1, 1], [], []>} : vector<24x24xf32>, vector<24x128xf32>, vector<24x128xf32> -> vector<24x128xf32>
    %c376 = arith.constant 376 : index
    %c0_67 = arith.constant 0 : index
    %180 = vector.load %arg1[%c376, %c0_67] : memref<384x32xf32, #tpu.memory_space<vmem>>, vector<8x1xf32>
    %c368 = arith.constant 368 : index
    %c0_68 = arith.constant 0 : index
    %181 = vector.load %arg1[%c368, %c0_68] : memref<384x32xf32, #tpu.memory_space<vmem>>, vector<8x8xf32>
    %182 = arith.negf %177 : vector<8x128xf32>
    %183 = math.exp %182 : vector<8x128xf32>
    %cst_69 = arith.constant 1.000000e+00 : f32
    %184 = vector.broadcast %cst_69 : f32 to vector<8x128xf32>
    %185 = arith.addf %184, %183 : vector<8x128xf32>
    %186 = arith.divf %184, %185 : vector<8x128xf32>
    %cst_70 = arith.constant dense<0.000000e+00> : vector<8x128xf32>
    %187 = tpu.matmul %181, %186, %cst_70 {dimension_numbers = #tpu.dot_dimension_numbers<[1], [0], [0], [1], [0, 0, 1, 1], [], []>} : vector<8x8xf32>, vector<8x128xf32>, vector<8x128xf32> -> vector<8x128xf32>
    %188 = vector.broadcast %180 : vector<8x1xf32> to vector<8x128xf32>
    %189 = arith.addf %188, %187 : vector<8x128xf32>
    %190 = arith.negf %189 : vector<8x128xf32>
    %191 = math.exp %190 : vector<8x128xf32>
    %cst_71 = arith.constant 1.000000e+00 : f32
    %192 = vector.broadcast %cst_71 : f32 to vector<8x128xf32>
    %193 = arith.addf %192, %191 : vector<8x128xf32>
    %194 = arith.divf %192, %193 : vector<8x128xf32>
    %195 = tpu.concatenate %194, %194, %194 in 0 : vector<8x128xf32>, vector<8x128xf32>, vector<8x128xf32> -> vector<24x128xf32>
    %196 = arith.mulf %179, %195 : vector<24x128xf32>
    %c0_72 = arith.constant 0 : index
    %c0_73 = arith.constant 0 : index
    %197 = vector.load %arg4[%c0_72, %c0_73] : memref<32x128xf32, #tpu.memory_space<vmem>>, vector<8x128xf32>
    tpu.vector_store %arg4[%c0_72, %c0_73], %177 {strides = array<i32>} : memref<32x128xf32, #tpu.memory_space<vmem>>, vector<8x128xf32>,
    %c8_74 = arith.constant 8 : index
    %c0_75 = arith.constant 0 : index
    %198 = vector.load %arg4[%c8_74, %c0_75] : memref<32x128xf32, #tpu.memory_space<vmem>>, vector<24x128xf32>
    tpu.vector_store %arg4[%c8_74, %c0_75], %196 {strides = array<i32>} : memref<32x128xf32, #tpu.memory_space<vmem>>, vector<24x128xf32>,
    return
  }
  func.func @transform_0(%arg0: i32) -> (i32, i32) {
    %c0_i32 = arith.constant 0 : i32
    %c0_i32_0 = arith.constant 0 : i32
    %c0_i32_1 = arith.constant 0 : i32
    return %c0_i32, %c0_i32_0 : i32, i32
  }
  func.func @transform_1(%arg0: i32) -> (i32, i32) {
    %c0_i32 = arith.constant 0 : i32
    %c0_i32_0 = arith.constant 0 : i32
    return %c0_i32, %arg0 : i32, i32
  }
  func.func @transform_2(%arg0: i32) -> (i32, i32) {
    %c0_i32 = arith.constant 0 : i32
    %c0_i32_0 = arith.constant 0 : i32
    return %c0_i32, %arg0 : i32, i32
  }
  func.func @transform_3(%arg0: i32) -> (i32, i32) {
    %c0_i32 = arith.constant 0 : i32
    %c0_i32_0 = arith.constant 0 : i32
    return %c0_i32, %arg0 : i32, i32
  }
}

</mosaic_0001>

<llo_original>
// kernel: bond_ffn_gvp.1
$region0: #{bond_ffn_gvp.1}
  #allocation0 [shape = 'u32[]', space=smem, size = 0x4, offset = 0x4, fixed_abs, tag = 'smem constant byte address 0x4 - core index']
  #allocation1 [shape = 'u32[72,128]{1,0:T(1,128)}', space=vmem, size = 0x9000, scoped, tag = 'internal scratch']
  %s0 = inlined_call_operand.vmem [shape: f32[384,32], index: 0, kind: input, shape index: {}]
  %s1 = inlined_call_operand.vmem [shape: f32[32,512], index: 1, kind: input, shape index: {}]
  %s2 = inlined_call_operand.vmem [shape: f32[32,512], index: 2, kind: input, shape index: {}]
  %s3 = inlined_call_operand.vmem [shape: f32[32,512], index: 3, kind: output, shape index: {}]
  %s4 = sld [smem:[#allocation0]]
  $region155: #{bond_ffn_gvp.1} parent=0
    _
  %s6 = ssub.s32 1, %s4
  %s7 = scalar_select 0, %s6, %s4
  $region1: #{bond_ffn_gvp.1} parent=0
    #allocation2 [shape = 'u8[32768]{0}', space=vmem, size = 0x8000, scoped, tag = 'input window, operand 1']
    #allocation3 [shape = 'u8[32768]{0}', space=vmem, size = 0x8000, scoped, tag = 'input window, operand 2']
    #allocation4 [shape = 'u8[32768]{0}', space=vmem, size = 0x8000, scoped, tag = 'output window, operand 0']
    loop: start=0, step=1, limit=6
    $region2: #{bond_ffn_gvp.1} parent=1 // loop_pre_header
      _
    $region3: #{bond_ffn_gvp.1} parent=1 // loop_header
      %s9 = sphi 0, %s13
      %p10 = scmp.ge.s32.totalorder %s9, 6
      %s17 = sphi 0, %s17
      %s19 = sphi 0, %s17
      %s20 = sphi 0, %s19
      %s34 = sphi 0, %s20
      %s40 = sphi 0, %s42
      %s43 = sphi 0, %s40
      %s44 = sphi 0, %s43
      %s60 = sphi 0, %s44
      %s66 = sphi 0, %s68
      %s69 = sphi 0, %s66
      %s70 = sphi 0, %s69
      %s86 = sphi 0, %s70
      %s92 = sphi 0, %s94
      %s95 = sphi 0, %s92
      %s96 = sphi 0, %s95
      %s112 = sphi 0, %s96
    $region4: #{bond_ffn_gvp.1} parent=1 // loop_header_branch
      %12 = sbr.rel (%p10) target = $region8
    $region5: #{bond_ffn_gvp.1} parent=1 // loop_body
      %s14 = ssub.s32 %s9, 1
      %s15 = ssub.s32 %s9, 2
      %s16 = sadd.s32 %s9, 1
      %s18 = sadd.s32 %s17, 1
      %p21 = scmp.eq.s32.totalorder %s9, 3
      %p22 = scmp.ne.s32.totalorder %s17, %s19
      %p23 = scmp.eq.s32.totalorder %s9, 0
      %p24 = por %p22, %p23
      %p25 = scmp.ne.s32.totalorder %s17, %s19
      %p26 = scmp.eq.s32.totalorder %s14, 3
      %p27 = por %p25, %p26
      %p28 = scmp.ne.s32.totalorder %s19, %s20
      %p29 = scmp.eq.s32.totalorder %s14, 0
      %p30 = por %p28, %p29
      %p31 = scmp.ne.s32.totalorder %s19, %s20
      %p32 = scmp.eq.s32.totalorder %s15, 3
      %p33 = por %p31, %p32
      %p35 = scmp.ne.s32.totalorder %s20, %s34
      %p36 = scmp.eq.s32.totalorder %s15, 0
      %p37 = por %p35, %p36
      %s38 = ssub.s32 %s9, %s16
      %p39 = scmp.eq.s32.totalorder %s38, 0
      %s41 = sadd.s32 %s40, 1
      %s42 = scalar_select %p39, %s40, %s41
      %p45 = pneg %p39
      %p46 = scmp.eq.s32.totalorder %s9, 3
      %p47 = por %p45, %p46
      %p48 = scmp.ne.s32.totalorder %s40, %s43
      %p49 = scmp.eq.s32.totalorder %s9, 0
      %p50 = por %p48, %p49
      %p51 = scmp.ne.s32.totalorder %s40, %s43
      %p52 = scmp.eq.s32.totalorder %s14, 3
      %p53 = por %p51, %p52
      %p54 = scmp.ne.s32.totalorder %s43, %s44
      %p55 = scmp.eq.s32.totalorder %s14, 0
      %p56 = por %p54, %p55
      %p57 = scmp.ne.s32.totalorder %s43, %s44
      %p58 = scmp.eq.s32.totalorder %s15, 3
      %p59 = por %p57, %p58
      %p61 = scmp.ne.s32.totalorder %s44, %s60
      %p62 = scmp.eq.s32.totalorder %s15, 0
      %p63 = por %p61, %p62
      %s64 = ssub.s32 %s9, %s16
      %p65 = scmp.eq.s32.totalorder %s64, 0
      %s67 = sadd.s32 %s66, 1
      %s68 = scalar_select %p65, %s66, %s67
      %p71 = pneg %p65
      %p72 = scmp.eq.s32.totalorder %s9, 3
      %p73 = por %p71, %p72
      %p74 = scmp.ne.s32.totalorder %s66, %s69
      %p75 = scmp.eq.s32.totalorder %s9, 0
      %p76 = por %p74, %p75
      %p77 = scmp.ne.s32.totalorder %s66, %s69
      %p78 = scmp.eq.s32.totalorder %s14, 3
      %p79 = por %p77, %p78
      %p80 = scmp.ne.s32.totalorder %s69, %s70
      %p81 = scmp.eq.s32.totalorder %s14, 0
      %p82 = por %p80, %p81
      %p83 = scmp.ne.s32.totalorder %s69, %s70
      %p84 = scmp.eq.s32.totalorder %s15, 3
      %p85 = por %p83, %p84
      %p87 = scmp.ne.s32.totalorder %s70, %s86
      %p88 = scmp.eq.s32.totalorder %s15, 0
      %p89 = por %p87, %p88
      %s90 = ssub.s32 %s9, %s16
      %p91 = scmp.eq.s32.totalorder %s90, 0
      %s93 = sadd.s32 %s92, 1
      %s94 = scalar_select %p91, %s92, %s93
      %p97 = pneg %p91
      %p98 = scmp.eq.s32.totalorder %s9, 3
      %p99 = por %p97, %p98
      %p100 = scmp.ne.s32.totalorder %s92, %s95
      %p101 = scmp.eq.s32.totalorder %s9, 0
      %p102 = por %p100, %p101
      %p103 = scmp.ne.s32.totalorder %s92, %s95
      %p104 = scmp.eq.s32.totalorder %s14, 3
      %p105 = por %p103, %p104
      %p106 = scmp.ne.s32.totalorder %s95, %s96
      %p107 = scmp.eq.s32.totalorder %s14, 0
      %p108 = por %p106, %p107
      %p109 = scmp.ne.s32.totalorder %s95, %s96
      %p110 = scmp.eq.s32.totalorder %s15, 3
      %p111 = por %p109, %p110
      %p113 = scmp.ne.s32.totalorder %s96, %s112
      %p114 = scmp.eq.s32.totalorder %s15, 0
      %p115 = por %p113, %p114
      %p116 = scmp.le.s32.totalorder 1, %s9
      %p117 = scmp.lt.s32.totalorder %s9, 5
      %p118 = pnand %p116, %p117
      %p119 = pneg %p118
      // Predicated region
      $region9: #{bond_ffn_gvp.1} parent=5 // pred_check
        _
      $region10: #{bond_ffn_gvp.1} parent=5 // pred_check_branch
        %121 = sbr.rel (%p118) target = $region12
      $region11: #{bond_ffn_gvp.1} parent=5 // pred_region
        %s122 = ssub.s32 %s9, 1
        // Predicated region
        $region13: #{bond_ffn_gvp.1} parent=11 // pred_check
          %p123 = pneg %p30
        $region14: #{bond_ffn_gvp.1} parent=11 // pred_check_branch
          %125 = sbr.rel (%p123) target = $region16
        $region15: #{bond_ffn_gvp.1} parent=11 // pred_region
          _
        $region16: #{bond_ffn_gvp.1} parent=11 // pred_fallthru
          _
      $region12: #{bond_ffn_gvp.1} parent=5 // pred_fallthru
        _
      %p126 = scmp.lt.s32.totalorder %s9, 4
      // Predicated region
      $region17: #{bond_ffn_gvp.1} parent=5 // pred_check
        %p127 = pneg %p126
      $region18: #{bond_ffn_gvp.1} parent=5 // pred_check_branch
        %129 = sbr.rel (%p127) target = $region20
      $region19: #{bond_ffn_gvp.1} parent=5 // pred_region
        // Predicated region
        $region21: #{bond_ffn_gvp.1} parent=19 // pred_check
          %p130 = pneg %p50
        $region22: #{bond_ffn_gvp.1} parent=19 // pred_check_branch
          %132 = sbr.rel (%p130) target = $region24
        $region23: #{bond_ffn_gvp.1} parent=19 // pred_region
          %s133 = sand.u32 %s40, 1
          %s134 = sand.u32 %s40, 1
          %s135 = smul.addr %s134, 32
          %s136 = scalar_lea.vmem [#allocation2], %s135
          %s137 = smul.addr %s9, 8
          %s138 = scalar_lea.vmem %s1, %s137
          // Predicated region
          $region25: #{bond_ffn_gvp.1} parent=23 // pred_check
            _
          $region26: #{bond_ffn_gvp.1} parent=23 // pred_check_branch
            %140 = sbr.rel (0) target = $region28
          $region27: #{bond_ffn_gvp.1} parent=23 // pred_region
            // Predicated region
            $region29: #{bond_ffn_gvp.1} parent=27 // pred_check
              _
            $region30: #{bond_ffn_gvp.1} parent=27 // pred_check_branch
              %142 = sbr.rel (0) target = $region32
            $region31: #{bond_ffn_gvp.1} parent=27 // pred_region
              // Predicated region
              $region44: #{bond_ffn_gvp.1} parent=31 // pred_check
                _
              $region45: #{bond_ffn_gvp.1} parent=31 // pred_check_branch
                %164 = sbr.rel (0) target = $region47
              $region46: #{bond_ffn_gvp.1} parent=31 // pred_region
                loop: start=0, step=1, limit=1
                $region48: #{bond_ffn_gvp.1} parent=46 // loop_pre_header
                  _
                $region49: #{bond_ffn_gvp.1} parent=46 // loop_header
                  %s166 = sphi 0, %s170
                  %p167 = scmp.ge.s32.totalorder %s166, 1
                  %s171 = sphi %s138, %s138
                  %s172 = sphi %s136, %s136
                $region50: #{bond_ffn_gvp.1} parent=46 // loop_header_branch
                  %169 = sbr.rel (%p167) target = $region54
                $region51: #{bond_ffn_gvp.1} parent=46 // loop_body
                  %v173 = vld [vmem:[%s171] sm:$0xff]
                  %174 = vst [vmem:[%s172] sm:$0xff] %v173
                  %v175 = vld [vmem:[%s171 + $0x20] sm:$0xff]
                  %176 = vst [vmem:[%s172 + $0x8] sm:$0xff] %v175
                  %v177 = vld [vmem:[%s171 + $0x40] sm:$0xff]
                  %178 = vst [vmem:[%s172 + $0x10] sm:$0xff] %v177
                  %v179 = vld [vmem:[%s171 + $0x60] sm:$0xff]
                  %180 = vst [vmem:[%s172 + $0x18] sm:$0xff] %v179
                $region52: #{bond_ffn_gvp.1} parent=46 // loop_footer
                  %s170 = sadd.s32 1, %s166
                $region53: #{bond_ffn_gvp.1} parent=46 // loop_footer_branch
                  %165 = sbr.rel target = $region49
                $region54: #{bond_ffn_gvp.1} parent=46 // loop_exit
                  _
              $region47: #{bond_ffn_gvp.1} parent=31 // pred_fallthru
                _
              // Predicated region
              $region55: #{bond_ffn_gvp.1} parent=31 // pred_check
                _
              $region56: #{bond_ffn_gvp.1} parent=31 // pred_check_branch
                %182 = sbr.rel target = $region58
              $region57: #{bond_ffn_gvp.1} parent=31 // pred_region
                _
              $region58: #{bond_ffn_gvp.1} parent=31 // pred_fallthru
                _
            $region32: #{bond_ffn_gvp.1} parent=27 // pred_fallthru
              _
            // Predicated region
            $region33: #{bond_ffn_gvp.1} parent=27 // pred_check
              _
            $region34: #{bond_ffn_gvp.1} parent=27 // pred_check_branch
              %144 = sbr.rel target = $region36
            $region35: #{bond_ffn_gvp.1} parent=27 // pred_region
              %s146 = ssub.s32 256, 1
              loop: start=0, step=1, limit=1
              $region37: #{bond_ffn_gvp.1} parent=35 // loop_pre_header
                _
              $region38: #{bond_ffn_gvp.1} parent=35 // loop_header
                %s148 = sphi 0, %s152
                %p149 = scmp.ge.s32.totalorder %s148, 1
                %s153 = sphi %s138, %s138
                %s154 = sphi %s136, %s136
              $region39: #{bond_ffn_gvp.1} parent=35 // loop_header_branch
                %151 = sbr.rel (%p149) target = $region43
              $region40: #{bond_ffn_gvp.1} parent=35 // loop_body
                %v155 = vld [vmem:[%s153] sm:%s146]
                %156 = vst [vmem:[%s154] sm:%s146] %v155
                %v157 = vld [vmem:[%s153 + $0x20] sm:%s146]
                %158 = vst [vmem:[%s154 + $0x8] sm:%s146] %v157
                %v159 = vld [vmem:[%s153 + $0x40] sm:%s146]
                %160 = vst [vmem:[%s154 + $0x10] sm:%s146] %v159
                %v161 = vld [vmem:[%s153 + $0x60] sm:%s146]
                %162 = vst [vmem:[%s154 + $0x18] sm:%s146] %v161
              $region41: #{bond_ffn_gvp.1} parent=35 // loop_footer
                %s152 = sadd.s32 1, %s148
              $region42: #{bond_ffn_gvp.1} parent=35 // loop_footer_branch
                %147 = sbr.rel target = $region38
              $region43: #{bond_ffn_gvp.1} parent=35 // loop_exit
                _
            $region36: #{bond_ffn_gvp.1} parent=27 // pred_fallthru
              _
          $region28: #{bond_ffn_gvp.1} parent=23 // pred_fallthru
            _
          %183 = vnop
        $region24: #{bond_ffn_gvp.1} parent=19 // pred_fallthru
          _
        // Predicated region
        $region59: #{bond_ffn_gvp.1} parent=19 // pred_check
          %p184 = pneg %p76
        $region60: #{bond_ffn_gvp.1} parent=19 // pred_check_branch
          %186 = sbr.rel (%p184) target = $region62
        $region61: #{bond_ffn_gvp.1} parent=19 // pred_region
          %s187 = sand.u32 %s66, 1
          %s188 = sand.u32 %s66, 1
          %s189 = smul.addr %s188, 32
          %s190 = scalar_lea.vmem [#allocation3], %s189
          %s191 = smul.addr %s9, 8
          %s192 = scalar_lea.vmem %s2, %s191
          // Predicated region
          $region63: #{bond_ffn_gvp.1} parent=61 // pred_check
            _
          $region64: #{bond_ffn_gvp.1} parent=61 // pred_check_branch
            %194 = sbr.rel (0) target = $region66
          $region65: #{bond_ffn_gvp.1} parent=61 // pred_region
            // Predicated region
            $region67: #{bond_ffn_gvp.1} parent=65 // pred_check
              _
            $region68: #{bond_ffn_gvp.1} parent=65 // pred_check_branch
              %196 = sbr.rel (0) target = $region70
            $region69: #{bond_ffn_gvp.1} parent=65 // pred_region
              // Predicated region
              $region82: #{bond_ffn_gvp.1} parent=69 // pred_check
                _
              $region83: #{bond_ffn_gvp.1} parent=69 // pred_check_branch
                %218 = sbr.rel (0) target = $region85
              $region84: #{bond_ffn_gvp.1} parent=69 // pred_region
                loop: start=0, step=1, limit=1
                $region86: #{bond_ffn_gvp.1} parent=84 // loop_pre_header
                  _
                $region87: #{bond_ffn_gvp.1} parent=84 // loop_header
                  %s220 = sphi 0, %s224
                  %p221 = scmp.ge.s32.totalorder %s220, 1
                  %s225 = sphi %s192, %s192
                  %s226 = sphi %s190, %s190
                $region88: #{bond_ffn_gvp.1} parent=84 // loop_header_branch
                  %223 = sbr.rel (%p221) target = $region92
                $region89: #{bond_ffn_gvp.1} parent=84 // loop_body
                  %v227 = vld [vmem:[%s225] sm:$0xff]
                  %228 = vst [vmem:[%s226] sm:$0xff] %v227
                  %v229 = vld [vmem:[%s225 + $0x20] sm:$0xff]
                  %230 = vst [vmem:[%s226 + $0x8] sm:$0xff] %v229
                  %v231 = vld [vmem:[%s225 + $0x40] sm:$0xff]
                  %232 = vst [vmem:[%s226 + $0x10] sm:$0xff] %v231
                  %v233 = vld [vmem:[%s225 + $0x60] sm:$0xff]
                  %234 = vst [vmem:[%s226 + $0x18] sm:$0xff] %v233
                $region90: #{bond_ffn_gvp.1} parent=84 // loop_footer
                  %s224 = sadd.s32 1, %s220
                $region91: #{bond_ffn_gvp.1} parent=84 // loop_footer_branch
                  %219 = sbr.rel target = $region87
                $region92: #{bond_ffn_gvp.1} parent=84 // loop_exit
                  _
              $region85: #{bond_ffn_gvp.1} parent=69 // pred_fallthru
                _
              // Predicated region
              $region93: #{bond_ffn_gvp.1} parent=69 // pred_check
                _
              $region94: #{bond_ffn_gvp.1} parent=69 // pred_check_branch
                %236 = sbr.rel target = $region96
              $region95: #{bond_ffn_gvp.1} parent=69 // pred_region
                _
              $region96: #{bond_ffn_gvp.1} parent=69 // pred_fallthru
                _
            $region70: #{bond_ffn_gvp.1} parent=65 // pred_fallthru
              _
            // Predicated region
            $region71: #{bond_ffn_gvp.1} parent=65 // pred_check
              _
            $region72: #{bond_ffn_gvp.1} parent=65 // pred_check_branch
              %198 = sbr.rel target = $region74
            $region73: #{bond_ffn_gvp.1} parent=65 // pred_region
              %s200 = ssub.s32 256, 1
              loop: start=0, step=1, limit=1
              $region75: #{bond_ffn_gvp.1} parent=73 // loop_pre_header
                _
              $region76: #{bond_ffn_gvp.1} parent=73 // loop_header
                %s202 = sphi 0, %s206
                %p203 = scmp.ge.s32.totalorder %s202, 1
                %s207 = sphi %s192, %s192
                %s208 = sphi %s190, %s190
              $region77: #{bond_ffn_gvp.1} parent=73 // loop_header_branch
                %205 = sbr.rel (%p203) target = $region81
              $region78: #{bond_ffn_gvp.1} parent=73 // loop_body
                %v209 = vld [vmem:[%s207] sm:%s200]
                %210 = vst [vmem:[%s208] sm:%s200] %v209
                %v211 = vld [vmem:[%s207 + $0x20] sm:%s200]
                %212 = vst [vmem:[%s208 + $0x8] sm:%s200] %v211
                %v213 = vld [vmem:[%s207 + $0x40] sm:%s200]
                %214 = vst [vmem:[%s208 + $0x10] sm:%s200] %v213
                %v215 = vld [vmem:[%s207 + $0x60] sm:%s200]
                %216 = vst [vmem:[%s208 + $0x18] sm:%s200] %v215
              $region79: #{bond_ffn_gvp.1} parent=73 // loop_footer
                %s206 = sadd.s32 1, %s202
              $region80: #{bond_ffn_gvp.1} parent=73 // loop_footer_branch
                %201 = sbr.rel target = $region76
              $region81: #{bond_ffn_gvp.1} parent=73 // loop_exit
                _
            $region74: #{bond_ffn_gvp.1} parent=65 // pred_fallthru
              _
          $region66: #{bond_ffn_gvp.1} parent=61 // pred_fallthru
            _
          %237 = vnop
        $region62: #{bond_ffn_gvp.1} parent=19 // pred_fallthru
          _
      $region20: #{bond_ffn_gvp.1} parent=5 // pred_fallthru
        _
      %p238 = scmp.le.s32.totalorder 1, %s9
      %p239 = scmp.lt.s32.totalorder %s9, 5
      %p240 = pnand %p238, %p239
      %p241 = pneg %p240
      // Predicated region
      $region97: #{bond_ffn_gvp.1} parent=5 // pred_check
        _
      $region98: #{bond_ffn_gvp.1} parent=5 // pred_check_branch
        %243 = sbr.rel (%p240) target = $region100
      $region99: #{bond_ffn_gvp.1} parent=5 // pred_region
        %s244 = ssub.s32 %s9, 1
        %s245 = sand.u32 %s43, 1
        %s246 = sand.u32 %s43, 1
        %s247 = smul.addr %s246, 32
        %s248 = scalar_lea.vmem [#allocation2], %s247
        // Predicated region
        $region101: #{bond_ffn_gvp.1} parent=99 // pred_check
          %p249 = pneg %p56
        $region102: #{bond_ffn_gvp.1} parent=99 // pred_check_branch
          %251 = sbr.rel (%p249) target = $region104
        $region103: #{bond_ffn_gvp.1} parent=99 // pred_region
          _
        $region104: #{bond_ffn_gvp.1} parent=99 // pred_fallthru
          _
        %s252 = sand.u32 %s69, 1
        %s253 = sand.u32 %s69, 1
        %s254 = smul.addr %s253, 32
        %s255 = scalar_lea.vmem [#allocation3], %s254
        // Predicated region
        $region105: #{bond_ffn_gvp.1} parent=99 // pred_check
          %p256 = pneg %p82
        $region106: #{bond_ffn_gvp.1} parent=99 // pred_check_branch
          %258 = sbr.rel (%p256) target = $region108
        $region107: #{bond_ffn_gvp.1} parent=99 // pred_region
          _
        $region108: #{bond_ffn_gvp.1} parent=99 // pred_fallthru
          _
        %p259 = pneg %p30
        %p260 = pneg %p27
        %s261 = sand.u32 %s43, 1
        %s262 = sand.u32 %s43, 1
        %s263 = smul.addr %s262, 32
        %s264 = scalar_lea.vmem [#allocation2], %s263
        %p265 = pneg %p56
        %p266 = pneg %p53
        %s267 = sand.u32 %s69, 1
        %s268 = sand.u32 %s69, 1
        %s269 = smul.addr %s268, 32
        %s270 = scalar_lea.vmem [#allocation3], %s269
        %p271 = pneg %p82
        %p272 = pneg %p79
        %p273 = pneg %p108
        %p274 = pneg %p105
        %s275 = sand.u32 %s95, 1
        %s276 = sand.u32 %s95, 1
        %s277 = smul.addr %s276, 32
        %s278 = scalar_lea.vmem [#allocation4], %s277
        %v279 = vld [vmem:[%s248] sm:$0xff]
        %v280 = vld [vmem:[%s248 + $0x8] sm:$0xff]
        %v281 = vld [vmem:[%s248 + $0x10] sm:$0xff]
        %v282 = vld [vmem:[%s248 + $0x18] sm:$0xff]
        %v283 = vld [vmem:[%s255] sm:$0xff]
        %v284 = vld [vmem:[%s255 + $0x8] sm:$0xff]
        %v285 = vld [vmem:[%s255 + $0x10] sm:$0xff]
        %v286 = vld [vmem:[%s255 + $0x18] sm:$0xff]
        %v287 = vld [vmem:[%s0] sm:$0xff]
        %v288 = vld [vmem:[%s0 + $0x8] sm:$0xff]
        %v289 = vld [vmem:[%s0 + $0x10] sm:$0xff]
        %vm290 = vcmask 195584
        %v292 = vsel %vm290, %v287, 0
        %v295 = vsel %vm290, %v288, 0
        %v298 = vsel %vm290, %v289, 0
        %300 = vmatpush.msra.mxu0 0.0
        %301 = vmatpush.msra.mxu0 0.0
        %302 = vmatpush.msra.mxu0 0.0
        %303 = vmatpush.msra.mxu0 0.0
        %304 = vmatpush.msra.mxu0 0.0
        %305 = vmatpush.msra.mxu0 0.0
        %306 = vmatpush.msra.mxu0 0.0
        %307 = vmatpush.msra.mxu0 0.0
        %308 = vmatpush.msra.mxu0 0.0
        %309 = vmatpush.msra.mxu0 0.0
        %310 = vmatpush.msra.mxu0 0.0
        %311 = vmatpush.msra.mxu0 0.0
        %312 = vmatpush.msra.mxu0 0.0
        %313 = vmatpush.msra.mxu0 %v282
        %314 = vmatpush.msra.mxu0 %v281
        %315 = vmatpush.msra.mxu0 %v280
        %316 = vmatmul.f32.gmra.mxu0 %v292
        %v317 = vpop.f32.mrf.mxu0
        %v318 = vadd.f32 0.0, %v317
        %319 = vmatmul.f32.gmra.mxu0 %v295
        %v320 = vpop.f32.mrf.mxu0
        %v321 = vadd.f32 0.0, %v320
        %322 = vmatmul.f32.gmra.mxu0 %v298
        %v323 = vpop.f32.mrf.mxu0
        %v324 = vadd.f32 0.0, %v323
        %325 = vdwg.mxu0
        %v326 = vmul.f32 %v318, %v318
        %v327 = vmul.f32 %v321, %v321
        %v328 = vadd.f32 %v326, %v327
        %v329 = vmul.f32 %v324, %v324
        %v330 = vadd.f32 %v328, %v329
        %v331 = vmax.f32 %v330, 1e-05
        %v332 = vrsqrt.pop %v331
        %v333 = vmul.f32 %v332, %v331
        %v334 = vmul.f32 %v333, %v332
        %v335 = vmul.f32 0.5, %v334
        %v336 = vsub.f32 1.5, %v335
        %v337 = vmul.f32 %v332, %v336
        %v338 = vmul.f32 %v331, %v337
        %vm339 = vcmp.eq.f32.partialorder %v331, inf
        %v340 = vsel %vm339, %v331, %v338
        %vm341 = vcmp.eq.f32.partialorder %v331, 0.0
        %v342 = vand.u32 %v331, 2147483648
        %v343 = vsel %vm341, %v342, %v340
        %v344 = vld [vmem:[%s0 + $0x28] sm:$0xff]
        %v345 = vld [vmem:[%s0 + $0x18] sm:$0xff]
        %vm346 = vcmask 64512
        %v348 = vsel %vm346, %v345, 0
        %350 = vmatpush.msra.mxu0 0.0
        %351 = vmatpush.msra.mxu0 0.0
        %352 = vmatpush.msra.mxu0 0.0
        %353 = vmatpush.msra.mxu0 0.0
        %354 = vmatpush.msra.mxu0 0.0
        %355 = vmatpush.msra.mxu0 0.0
        %356 = vmatpush.msra.mxu0 0.0
        %357 = vmatpush.msra.mxu0 0.0
        %358 = vmatpush.msra.mxu0 0.0
        %359 = vmatpush.msra.mxu0 0.0
        %360 = vmatpush.msra.mxu0 0.0
        %361 = vmatpush.msra.mxu0 0.0
        %362 = vmatpush.msra.mxu0 0.0
        %363 = vmatpush.msra.mxu0 0.0
        %364 = vmatpush.msra.mxu0 0.0
        %365 = vmatpush.msra.mxu0 %v279
        %366 = vmatmul.f32.gmra.mxu0 %v348
        %v367 = vpop.f32.mrf.mxu0
        %v368 = vadd.f32 0.0, %v367
        %369 = vdwg.mxu0
        %371 = vset.pattern.permute.xlu0 0
        %372 = vperm.xlu0 %371, %v344
        %v373 = vpop.permute.xlu0 %372
        %v375 = vadd.f32 %v373, %v368
        %v376 = vld [vmem:[%s0 + $0x20] sm:$0xff]
        %v378 = vsel %vm346, %v376, 0
        %380 = vmatpush.msra.mxu0 0.0
        %381 = vmatpush.msra.mxu0 0.0
        %382 = vmatpush.msra.mxu0 0.0
        %383 = vmatpush.msra.mxu0 0.0
        %384 = vmatpush.msra.mxu0 0.0
        %385 = vmatpush.msra.mxu0 0.0
        %386 = vmatpush.msra.mxu0 0.0
        %387 = vmatpush.msra.mxu0 0.0
        %388 = vmatpush.msra.mxu0 0.0
        %389 = vmatpush.msra.mxu0 0.0
        %390 = vmatpush.msra.mxu0 0.0
        %391 = vmatpush.msra.mxu0 0.0
        %392 = vmatpush.msra.mxu0 0.0
        %393 = vmatpush.msra.mxu0 0.0
        %394 = vmatpush.msra.mxu0 0.0
        %395 = vmatpush.msra.mxu0 %v343
        %396 = vmatmul.f32.gmra.mxu0 %v378
        %v397 = vpop.f32.mrf.mxu0
        %v398 = vadd.f32 0.0, %v397
        %399 = vdwg.mxu0
        %v400 = vadd.f32 %v375, %v398
        %v401 = vld [vmem:[%s0 + $0x30] sm:$0xff]
        %v402 = vld [vmem:[%s0 + $0x38] sm:$0xff]
        %v403 = vld [vmem:[%s0 + $0x40] sm:$0xff]
        %v405 = vsel %vm290, %v401, 0
        %v408 = vsel %vm290, %v402, 0
        %v411 = vsel %vm290, %v403, 0
        %413 = vmatpush.msra.mxu0 0.0
        %414 = vmatpush.msra.mxu0 0.0
        %415 = vmatpush.msra.mxu0 0.0
        %416 = vmatpush.msra.mxu0 0.0
        %417 = vmatpush.msra.mxu0 0.0
        %418 = vmatpush.msra.mxu0 0.0
        %419 = vmatpush.msra.mxu0 0.0
        %420 = vmatpush.msra.mxu0 0.0
        %421 = vmatpush.msra.mxu0 0.0
        %422 = vmatpush.msra.mxu0 0.0
        %423 = vmatpush.msra.mxu0 0.0
        %424 = vmatpush.msra.mxu0 0.0
        %425 = vmatpush.msra.mxu0 0.0
        %426 = vmatpush.msra.mxu0 %v324
        %427 = vmatpush.msra.mxu0 %v321
        %428 = vmatpush.msra.mxu0 %v318
        %429 = vmatmul.f32.gmra.mxu0 %v405
        %v430 = vpop.f32.mrf.mxu0
        %v431 = vadd.f32 0.0, %v430
        %432 = vmatmul.f32.gmra.mxu0 %v408
        %v433 = vpop.f32.mrf.mxu0
        %v434 = vadd.f32 0.0, %v433
        %435 = vmatmul.f32.gmra.mxu0 %v411
        %v436 = vpop.f32.mrf.mxu0
        %v437 = vadd.f32 0.0, %v436
        %438 = vdwg.mxu0
        %v439 = vld [vmem:[%s0 + $0x50] sm:$0xff]
        %v440 = vld [vmem:[%s0 + $0x48] sm:$0xff]
        %v441 = vxor.u32 %v400, 2147483648
        %v442 = vmul.f32 %v441, 1.442695
        %v443 = vpow.pop %v442
        %v444 = vadd.f32 %v443, 1.0
        %v445 = vrcp.pop %v444
        %v446 = vmul.f32 %v444, %v445
        %v447 = vsub.f32 1.0, %v446
        %v448 = vmul.f32 %v445, %v447
        %v449 = vadd.f32 %v445, %v448
        %vm450 = vweird.f32 %v444
        %vm451 = vweird.f32 %v445
        %vm452 = vmor %vm450, %vm451
        %v453 = vsel %vm452, %v445, %v449
        %v454 = vand.u32 2147483647, %v444
        %vm455 = vcmp.eq.f32.partialorder %v454, 8.507059e+37
        %v456 = vand.u32 %v444, 2147483648
        %v457 = vor.u32 1.1754944e-38, %v456
        %v458 = vsel %vm455, %v457, %v453
        %v459 = vmul.f32 1.0, %v458
        %v461 = vsel %vm346, %v440, 0
        %463 = vmatpush.msra.mxu0 0.0
        %464 = vmatpush.msra.mxu0 0.0
        %465 = vmatpush.msra.mxu0 0.0
        %466 = vmatpush.msra.mxu0 0.0
        %467 = vmatpush.msra.mxu0 0.0
        %468 = vmatpush.msra.mxu0 0.0
        %469 = vmatpush.msra.mxu0 0.0
        %470 = vmatpush.msra.mxu0 0.0
        %471 = vmatpush.msra.mxu0 0.0
        %472 = vmatpush.msra.mxu0 0.0
        %473 = vmatpush.msra.mxu0 0.0
        %474 = vmatpush.msra.mxu0 0.0
        %475 = vmatpush.msra.mxu0 0.0
        %476 = vmatpush.msra.mxu0 0.0
        %477 = vmatpush.msra.mxu0 0.0
        %478 = vmatpush.msra.mxu0 %v459
        %479 = vmatmul.f32.gmra.mxu0 %v461
        %v480 = vpop.f32.mrf.mxu0
        %v481 = vadd.f32 0.0, %v480
        %482 = vdwg.mxu0
        %484 = vset.pattern.permute.xlu0 0
        %485 = vperm.xlu0 %484, %v439
        %v486 = vpop.permute.xlu0 %485
        %v488 = vadd.f32 %v486, %v481
        %v489 = vxor.u32 %v488, 2147483648
        %v490 = vmul.f32 %v489, 1.442695
        %v491 = vpow.pop %v490
        %v492 = vadd.f32 %v491, 1.0
        %v493 = vrcp.pop %v492
        %v494 = vmul.f32 %v492, %v493
        %v495 = vsub.f32 1.0, %v494
        %v496 = vmul.f32 %v493, %v495
        %v497 = vadd.f32 %v493, %v496
        %vm498 = vweird.f32 %v492
        %vm499 = vweird.f32 %v493
        %vm500 = vmor %vm498, %vm499
        %v501 = vsel %vm500, %v493, %v497
        %v502 = vand.u32 2147483647, %v492
        %vm503 = vcmp.eq.f32.partialorder %v502, 8.507059e+37
        %v504 = vand.u32 %v492, 2147483648
        %v505 = vor.u32 1.1754944e-38, %v504
        %v506 = vsel %vm503, %v505, %v501
        %v507 = vmul.f32 1.0, %v506
        %v508 = vmul.f32 %v431, %v507
        %v509 = vmul.f32 %v434, %v507
        %v510 = vmul.f32 %v437, %v507
        %v511 = vld [vmem:[%s0 + $0x58] sm:$0xff]
        %v512 = vld [vmem:[%s0 + $0x60] sm:$0xff]
        %v513 = vld [vmem:[%s0 + $0x68] sm:$0xff]
        %v515 = vsel %vm290, %v511, 0
        %v518 = vsel %vm290, %v512, 0
        %v521 = vsel %vm290, %v513, 0
        %523 = vmatpush.msra.mxu0 0.0
        %524 = vmatpush.msra.mxu0 0.0
        %525 = vmatpush.msra.mxu0 0.0
        %526 = vmatpush.msra.mxu0 0.0
        %527 = vmatpush.msra.mxu0 0.0
        %528 = vmatpush.msra.mxu0 0.0
        %529 = vmatpush.msra.mxu0 0.0
        %530 = vmatpush.msra.mxu0 0.0
        %531 = vmatpush.msra.mxu0 0.0
        %532 = vmatpush.msra.mxu0 0.0
        %533 = vmatpush.msra.mxu0 0.0
        %534 = vmatpush.msra.mxu0 0.0
        %535 = vmatpush.msra.mxu0 0.0
        %536 = vmatpush.msra.mxu0 %v286
        %537 = vmatpush.msra.mxu0 %v285
        %538 = vmatpush.msra.mxu0 %v284
        %539 = vmatmul.f32.gmra.mxu0 %v515
        %v540 = vpop.f32.mrf.mxu0
        %v541 = vadd.f32 0.0, %v540
        %542 = vmatmul.f32.gmra.mxu0 %v518
        %v543 = vpop.f32.mrf.mxu0
        %v544 = vadd.f32 0.0, %v543
        %545 = vmatmul.f32.gmra.mxu0 %v521
        %v546 = vpop.f32.mrf.mxu0
        %v547 = vadd.f32 0.0, %v546
        %548 = vdwg.mxu0
        %v549 = vmul.f32 %v541, %v541
        %v550 = vmul.f32 %v544, %v544
        %v551 = vadd.f32 %v549, %v550
        %v552 = vmul.f32 %v547, %v547
        %v553 = vadd.f32 %v551, %v552
        %v554 = vmax.f32 %v553, 1e-05
        %v555 = vrsqrt.pop %v554
        %v556 = vmul.f32 %v555, %v554
        %v557 = vmul.f32 %v556, %v555
        %v558 = vmul.f32 0.5, %v557
        %v559 = vsub.f32 1.5, %v558
        %v560 = vmul.f32 %v555, %v559
        %v561 = vmul.f32 %v554, %v560
        %vm562 = vcmp.eq.f32.partialorder %v554, inf
        %v563 = vsel %vm562, %v554, %v561
        %vm564 = vcmp.eq.f32.partialorder %v554, 0.0
        %v565 = vand.u32 %v554, 2147483648
        %v566 = vsel %vm564, %v565, %v563
        %v567 = vld [vmem:[%s0 + $0x80] sm:$0xff]
        %v568 = vld [vmem:[%s0 + $0x70] sm:$0xff]
        %v570 = vsel %vm346, %v568, 0
        %572 = vmatpush.msra.mxu0 0.0
        %573 = vmatpush.msra.mxu0 0.0
        %574 = vmatpush.msra.mxu0 0.0
        %575 = vmatpush.msra.mxu0 0.0
        %576 = vmatpush.msra.mxu0 0.0
        %577 = vmatpush.msra.mxu0 0.0
        %578 = vmatpush.msra.mxu0 0.0
        %579 = vmatpush.msra.mxu0 0.0
        %580 = vmatpush.msra.mxu0 0.0
        %581 = vmatpush.msra.mxu0 0.0
        %582 = vmatpush.msra.mxu0 0.0
        %583 = vmatpush.msra.mxu0 0.0
        %584 = vmatpush.msra.mxu0 0.0
        %585 = vmatpush.msra.mxu0 0.0
        %586 = vmatpush.msra.mxu0 0.0
        %587 = vmatpush.msra.mxu0 %v283
        %588 = vmatmul.f32.gmra.mxu0 %v570
        %v589 = vpop.f32.mrf.mxu0
        %v590 = vadd.f32 0.0, %v589
        %591 = vdwg.mxu0
        %593 = vset.pattern.permute.xlu0 0
        %594 = vperm.xlu0 %593, %v567
        %v595 = vpop.permute.xlu0 %594
        %v597 = vadd.f32 %v595, %v590
        %v598 = vld [vmem:[%s0 + $0x78] sm:$0xff]
        %v600 = vsel %vm346, %v598, 0
        %602 = vmatpush.msra.mxu0 0.0
        %603 = vmatpush.msra.mxu0 0.0
        %604 = vmatpush.msra.mxu0 0.0
        %605 = vmatpush.msra.mxu0 0.0
        %606 = vmatpush.msra.mxu0 0.0
        %607 = vmatpush.msra.mxu0 0.0
        %608 = vmatpush.msra.mxu0 0.0
        %609 = vmatpush.msra.mxu0 0.0
        %610 = vmatpush.msra.mxu0 0.0
        %611 = vmatpush.msra.mxu0 0.0
        %612 = vmatpush.msra.mxu0 0.0
        %613 = vmatpush.msra.mxu0 0.0
        %614 = vmatpush.msra.mxu0 0.0
        %615 = vmatpush.msra.mxu0 0.0
        %616 = vmatpush.msra.mxu0 0.0
        %617 = vmatpush.msra.mxu0 %v566
        %618 = vmatmul.f32.gmra.mxu0 %v600
        %v619 = vpop.f32.mrf.mxu0
        %v620 = vadd.f32 0.0, %v619
        %621 = vdwg.mxu0
        %v622 = vadd.f32 %v597, %v620
        %v623 = vld [vmem:[%s0 + $0x88] sm:$0xff]
        %v624 = vld [vmem:[%s0 + $0x90] sm:$0xff]
        %v625 = vld [vmem:[%s0 + $0x98] sm:$0xff]
        %v627 = vsel %vm290, %v623, 0
        %v630 = vsel %vm290, %v624, 0
        %v633 = vsel %vm290, %v625, 0
        %635 = vmatpush.msra.mxu0 0.0
        %636 = vmatpush.msra.mxu0 0.0
        %637 = vmatpush.msra.mxu0 0.0
        %638 = vmatpush.msra.mxu0 0.0
        %639 = vmatpush.msra.mxu0 0.0
        %640 = vmatpush.msra.mxu0 0.0
        %641 = vmatpush.msra.mxu0 0.0
        %642 = vmatpush.msra.mxu0 0.0
        %643 = vmatpush.msra.mxu0 0.0
        %644 = vmatpush.msra.mxu0 0.0
        %645 = vmatpush.msra.mxu0 0.0
        %646 = vmatpush.msra.mxu0 0.0
        %647 = vmatpush.msra.mxu0 0.0
        %648 = vmatpush.msra.mxu0 %v547
        %649 = vmatpush.msra.mxu0 %v544
        %650 = vmatpush.msra.mxu0 %v541
        %651 = vmatmul.f32.gmra.mxu0 %v627
        %v652 = vpop.f32.mrf.mxu0
        %v653 = vadd.f32 0.0, %v652
        %654 = vmatmul.f32.gmra.mxu0 %v630
        %v655 = vpop.f32.mrf.mxu0
        %v656 = vadd.f32 0.0, %v655
        %657 = vmatmul.f32.gmra.mxu0 %v633
        %v658 = vpop.f32.mrf.mxu0
        %v659 = vadd.f32 0.0, %v658
        %660 = vdwg.mxu0
        %v661 = vld [vmem:[%s0 + $0xa8] sm:$0xff]
        %v662 = vld [vmem:[%s0 + $0xa0] sm:$0xff]
        %v663 = vxor.u32 %v622, 2147483648
        %v664 = vmul.f32 %v663, 1.442695
        %v665 = vpow.pop %v664
        %v666 = vadd.f32 %v665, 1.0
        %v667 = vrcp.pop %v666
        %v668 = vmul.f32 %v666, %v667
        %v669 = vsub.f32 1.0, %v668
        %v670 = vmul.f32 %v667, %v669
        %v671 = vadd.f32 %v667, %v670
        %vm672 = vweird.f32 %v666
        %vm673 = vweird.f32 %v667
        %vm674 = vmor %vm672, %vm673
        %v675 = vsel %vm674, %v667, %v671
        %v676 = vand.u32 2147483647, %v666
        %vm677 = vcmp.eq.f32.partialorder %v676, 8.507059e+37
        %v678 = vand.u32 %v666, 2147483648
        %v679 = vor.u32 1.1754944e-38, %v678
        %v680 = vsel %vm677, %v679, %v675
        %v681 = vmul.f32 1.0, %v680
        %v683 = vsel %vm346, %v662, 0
        %685 = vmatpush.msra.mxu0 0.0
        %686 = vmatpush.msra.mxu0 0.0
        %687 = vmatpush.msra.mxu0 0.0
        %688 = vmatpush.msra.mxu0 0.0
        %689 = vmatpush.msra.mxu0 0.0
        %690 = vmatpush.msra.mxu0 0.0
        %691 = vmatpush.msra.mxu0 0.0
        %692 = vmatpush.msra.mxu0 0.0
        %693 = vmatpush.msra.mxu0 0.0
        %694 = vmatpush.msra.mxu0 0.0
        %695 = vmatpush.msra.mxu0 0.0
        %696 = vmatpush.msra.mxu0 0.0
        %697 = vmatpush.msra.mxu0 0.0
        %698 = vmatpush.msra.mxu0 0.0
        %699 = vmatpush.msra.mxu0 0.0
        %700 = vmatpush.msra.mxu0 %v681
        %701 = vmatmul.f32.gmra.mxu0 %v683
        %v702 = vpop.f32.mrf.mxu0
        %v703 = vadd.f32 0.0, %v702
        %704 = vdwg.mxu0
        %706 = vset.pattern.permute.xlu0 0
        %707 = vperm.xlu0 %706, %v661
        %v708 = vpop.permute.xlu0 %707
        %v710 = vadd.f32 %v708, %v703
        %v711 = vxor.u32 %v710, 2147483648
        %v712 = vmul.f32 %v711, 1.442695
        %v713 = vpow.pop %v712
        %v714 = vadd.f32 %v713, 1.0
        %v715 = vrcp.pop %v714
        %v716 = vmul.f32 %v714, %v715
        %v717 = vsub.f32 1.0, %v716
        %v718 = vmul.f32 %v715, %v717
        %v719 = vadd.f32 %v715, %v718
        %vm720 = vweird.f32 %v714
        %vm721 = vweird.f32 %v715
        %vm722 = vmor %vm720, %vm721
        %v723 = vsel %vm722, %v715, %v719
        %v724 = vand.u32 2147483647, %v714
        %vm725 = vcmp.eq.f32.partialorder %v724, 8.507059e+37
        %v726 = vand.u32 %v714, 2147483648
        %v727 = vor.u32 1.1754944e-38, %v726
        %v728 = vsel %vm725, %v727, %v723
        %v729 = vmul.f32 1.0, %v728
        %v730 = vmul.f32 %v653, %v729
        %v731 = vmul.f32 %v656, %v729
        %v732 = vmul.f32 %v659, %v729
        %v733 = vmul.f32 %v400, %v622
        %v734 = vmul.f32 %v508, %v730
        %v735 = vmul.f32 %v509, %v731
        %v736 = vadd.f32 %v734, %v735
        %v737 = vmul.f32 %v510, %v732
        %v738 = vadd.f32 %v736, %v737
        %v739 = vadd.f32 %v508, %v730
        %v740 = vadd.f32 %v509, %v731
        %v741 = vadd.f32 %v510, %v732
        %v742 = vmul.f32 %v739, 0.5
        %v743 = vmul.f32 %v740, 0.5
        %v744 = vmul.f32 %v741, 0.5
        %v745 = vmul.f32 %v509, %v732
        %v746 = vmul.f32 %v510, %v731
        %v747 = vsub.f32 %v745, %v746
        %v748 = vmul.f32 %v510, %v730
        %v749 = vmul.f32 %v508, %v732
        %v750 = vsub.f32 %v748, %v749
        %v751 = vmul.f32 %v508, %v731
        %v752 = vmul.f32 %v509, %v730
        %v753 = vsub.f32 %v751, %v752
        %v754 = vld [vmem:[%s0 + $0xb0] sm:$0xff]
        %v755 = vld [vmem:[%s0 + $0xb8] sm:$0xff]
        %v756 = vld [vmem:[%s0 + $0xc0] sm:$0xff]
        %v757 = vld [vmem:[%s0 + $0xc8] sm:$0xff]
        %v758 = vld [vmem:[%s0 + $0xd0] sm:$0xff]
        %v759 = vld [vmem:[%s0 + $0xd8] sm:$0xff]
        %v761 = vsel %vm290, %v757, 0
        %v764 = vsel %vm290, %v758, 0
        %v767 = vsel %vm290, %v759, 0
        %769 = vmatpush.msra.mxu0 0.0
        %770 = vmatpush.msra.mxu0 0.0
        %771 = vmatpush.msra.mxu0 0.0
        %772 = vmatpush.msra.mxu0 0.0
        %773 = vmatpush.msra.mxu0 0.0
        %774 = vmatpush.msra.mxu0 0.0
        %775 = vmatpush.msra.mxu0 0.0
        %776 = vmatpush.msra.mxu0 0.0
        %777 = vmatpush.msra.mxu0 0.0
        %778 = vmatpush.msra.mxu0 0.0
        %779 = vmatpush.msra.mxu0 0.0
        %780 = vmatpush.msra.mxu0 0.0
        %781 = vmatpush.msra.mxu0 0.0
        %782 = vmatpush.msra.mxu0 %v753
        %783 = vmatpush.msra.mxu0 %v750
        %784 = vmatpush.msra.mxu0 %v747
        %785 = vmatmul.f32.gmra.mxu0 %v761
        %v786 = vpop.f32.mrf.mxu0
        %v787 = vadd.f32 0.0, %v786
        %788 = vmatmul.f32.gmra.mxu0 %v764
        %v789 = vpop.f32.mrf.mxu0
        %v790 = vadd.f32 0.0, %v789
        %791 = vmatmul.f32.gmra.mxu0 %v767
        %v792 = vpop.f32.mrf.mxu0
        %v793 = vadd.f32 0.0, %v792
        %794 = vdwg.mxu0
        %v796 = vsel %vm290, %v754, 0
        %v799 = vsel %vm290, %v755, 0
        %v802 = vsel %vm290, %v756, 0
        %804 = vmatpush.msra.mxu0 0.0
        %805 = vmatpush.msra.mxu0 0.0
        %806 = vmatpush.msra.mxu0 0.0
        %807 = vmatpush.msra.mxu0 0.0
        %808 = vmatpush.msra.mxu0 0.0
        %809 = vmatpush.msra.mxu0 0.0
        %810 = vmatpush.msra.mxu0 0.0
        %811 = vmatpush.msra.mxu0 0.0
        %812 = vmatpush.msra.mxu0 0.0
        %813 = vmatpush.msra.mxu0 0.0
        %814 = vmatpush.msra.mxu0 0.0
        %815 = vmatpush.msra.mxu0 0.0
        %816 = vmatpush.msra.mxu0 0.0
        %817 = vmatpush.msra.mxu0 %v744
        %818 = vmatpush.msra.mxu0 %v743
        %819 = vmatpush.msra.mxu0 %v742
        %820 = vmatmul.f32.gmra.mxu0 %v796
        %v821 = vpop.f32.mrf.mxu0
        %v822 = vadd.f32 %v787, %v821
        %823 = vmatmul.f32.gmra.mxu0 %v799
        %v824 = vpop.f32.mrf.mxu0
        %v825 = vadd.f32 %v790, %v824
        %826 = vmatmul.f32.gmra.mxu0 %v802
        %v827 = vpop.f32.mrf.mxu0
        %v828 = vadd.f32 %v793, %v827
        %829 = vdwg.mxu0
        %v830 = vmul.f32 %v822, %v822
        %v831 = vmul.f32 %v825, %v825
        %v832 = vadd.f32 %v830, %v831
        %v833 = vmul.f32 %v828, %v828
        %v834 = vadd.f32 %v832, %v833
        %v835 = vmax.f32 %v834, 1e-05
        %v836 = vrsqrt.pop %v835
        %v837 = vmul.f32 %v836, %v835
        %v838 = vmul.f32 %v837, %v836
        %v839 = vmul.f32 0.5, %v838
        %v840 = vsub.f32 1.5, %v839
        %v841 = vmul.f32 %v836, %v840
        %v842 = vmul.f32 %v835, %v841
        %vm843 = vcmp.eq.f32.partialorder %v835, inf
        %v844 = vsel %vm843, %v835, %v842
        %vm845 = vcmp.eq.f32.partialorder %v835, 0.0
        %v846 = vand.u32 %v835, 2147483648
        %v847 = vsel %vm845, %v846, %v844
        %v848 = vld [vmem:[%s0 + $0xf8] sm:$0xff]
        %v849 = vld [vmem:[%s0 + $0xe0] sm:$0xff]
        %v851 = vsel %vm346, %v849, 0
        %853 = vmatpush.msra.mxu0 0.0
        %854 = vmatpush.msra.mxu0 0.0
        %855 = vmatpush.msra.mxu0 0.0
        %856 = vmatpush.msra.mxu0 0.0
        %857 = vmatpush.msra.mxu0 0.0
        %858 = vmatpush.msra.mxu0 0.0
        %859 = vmatpush.msra.mxu0 0.0
        %860 = vmatpush.msra.mxu0 0.0
        %861 = vmatpush.msra.mxu0 0.0
        %862 = vmatpush.msra.mxu0 0.0
        %863 = vmatpush.msra.mxu0 0.0
        %864 = vmatpush.msra.mxu0 0.0
        %865 = vmatpush.msra.mxu0 0.0
        %866 = vmatpush.msra.mxu0 0.0
        %867 = vmatpush.msra.mxu0 0.0
        %868 = vmatpush.msra.mxu0 %v733
        %869 = vmatmul.f32.gmra.mxu0 %v851
        %v870 = vpop.f32.mrf.mxu0
        %v871 = vadd.f32 0.0, %v870
        %872 = vdwg.mxu0
        %874 = vset.pattern.permute.xlu0 0
        %875 = vperm.xlu0 %874, %v848
        %v876 = vpop.permute.xlu0 %875
        %v878 = vadd.f32 %v876, %v871
        %v879 = vld [vmem:[%s0 + $0xe8] sm:$0xff]
        %v881 = vsel %vm346, %v879, 0
        %883 = vmatpush.msra.mxu0 0.0
        %884 = vmatpush.msra.mxu0 0.0
        %885 = vmatpush.msra.mxu0 0.0
        %886 = vmatpush.msra.mxu0 0.0
        %887 = vmatpush.msra.mxu0 0.0
        %888 = vmatpush.msra.mxu0 0.0
        %889 = vmatpush.msra.mxu0 0.0
        %890 = vmatpush.msra.mxu0 0.0
        %891 = vmatpush.msra.mxu0 0.0
        %892 = vmatpush.msra.mxu0 0.0
        %893 = vmatpush.msra.mxu0 0.0
        %894 = vmatpush.msra.mxu0 0.0
        %895 = vmatpush.msra.mxu0 0.0
        %896 = vmatpush.msra.mxu0 0.0
        %897 = vmatpush.msra.mxu0 0.0
        %898 = vmatpush.msra.mxu0 %v738
        %899 = vmatmul.f32.gmra.mxu0 %v881
        %v900 = vpop.f32.mrf.mxu0
        %v901 = vadd.f32 0.0, %v900
        %902 = vdwg.mxu0
        %v903 = vadd.f32 %v878, %v901
        %v904 = vld [vmem:[%s0 + $0xf0] sm:$0xff]
        %v906 = vsel %vm346, %v904, 0
        %908 = vmatpush.msra.mxu0 0.0
        %909 = vmatpush.msra.mxu0 0.0
        %910 = vmatpush.msra.mxu0 0.0
        %911 = vmatpush.msra.mxu0 0.0
        %912 = vmatpush.msra.mxu0 0.0
        %913 = vmatpush.msra.mxu0 0.0
        %914 = vmatpush.msra.mxu0 0.0
        %915 = vmatpush.msra.mxu0 0.0
        %916 = vmatpush.msra.mxu0 0.0
        %917 = vmatpush.msra.mxu0 0.0
        %918 = vmatpush.msra.mxu0 0.0
        %919 = vmatpush.msra.mxu0 0.0
        %920 = vmatpush.msra.mxu0 0.0
        %921 = vmatpush.msra.mxu0 0.0
        %922 = vmatpush.msra.mxu0 0.0
        %923 = vmatpush.msra.mxu0 %v847
        %924 = vmatmul.f32.gmra.mxu0 %v906
        %v925 = vpop.f32.mrf.mxu0
        %v926 = vadd.f32 0.0, %v925
        %927 = vdwg.mxu0
        %v928 = vadd.f32 %v903, %v926
        %v929 = vld [vmem:[%s0 + $0x100] sm:$0xff]
        %v930 = vld [vmem:[%s0 + $0x108] sm:$0xff]
        %v931 = vld [vmem:[%s0 + $0x110] sm:$0xff]
        %v933 = vsel %vm290, %v929, 0
        %v936 = vsel %vm290, %v930, 0
        %v939 = vsel %vm290, %v931, 0
        %941 = vmatpush.msra.mxu0 0.0
        %942 = vmatpush.msra.mxu0 0.0
        %943 = vmatpush.msra.mxu0 0.0
        %944 = vmatpush.msra.mxu0 0.0
        %945 = vmatpush.msra.mxu0 0.0
        %946 = vmatpush.msra.mxu0 0.0
        %947 = vmatpush.msra.mxu0 0.0
        %948 = vmatpush.msra.mxu0 0.0
        %949 = vmatpush.msra.mxu0 0.0
        %950 = vmatpush.msra.mxu0 0.0
        %951 = vmatpush.msra.mxu0 0.0
        %952 = vmatpush.msra.mxu0 0.0
        %953 = vmatpush.msra.mxu0 0.0
        %954 = vmatpush.msra.mxu0 %v828
        %955 = vmatpush.msra.mxu0 %v825
        %956 = vmatpush.msra.mxu0 %v822
        %957 = vmatmul.f32.gmra.mxu0 %v933
        %v958 = vpop.f32.mrf.mxu0
        %v959 = vadd.f32 0.0, %v958
        %960 = vmatmul.f32.gmra.mxu0 %v936
        %v961 = vpop.f32.mrf.mxu0
        %v962 = vadd.f32 0.0, %v961
        %963 = vmatmul.f32.gmra.mxu0 %v939
        %v964 = vpop.f32.mrf.mxu0
        %v965 = vadd.f32 0.0, %v964
        %966 = vdwg.mxu0
        %v967 = vld [vmem:[%s0 + $0x120] sm:$0xff]
        %v968 = vld [vmem:[%s0 + $0x118] sm:$0xff]
        %v969 = vxor.u32 %v928, 2147483648
        %v970 = vmul.f32 %v969, 1.442695
        %v971 = vpow.pop %v970
        %v972 = vadd.f32 %v971, 1.0
        %v973 = vrcp.pop %v972
        %v974 = vmul.f32 %v972, %v973
        %v975 = vsub.f32 1.0, %v974
        %v976 = vmul.f32 %v973, %v975
        %v977 = vadd.f32 %v973, %v976
        %vm978 = vweird.f32 %v972
        %vm979 = vweird.f32 %v973
        %vm980 = vmor %vm978, %vm979
        %v981 = vsel %vm980, %v973, %v977
        %v982 = vand.u32 2147483647, %v972
        %vm983 = vcmp.eq.f32.partialorder %v982, 8.507059e+37
        %v984 = vand.u32 %v972, 2147483648
        %v985 = vor.u32 1.1754944e-38, %v984
        %v986 = vsel %vm983, %v985, %v981
        %v987 = vmul.f32 1.0, %v986
        %v989 = vsel %vm346, %v968, 0
        %991 = vmatpush.msra.mxu0 0.0
        %992 = vmatpush.msra.mxu0 0.0
        %993 = vmatpush.msra.mxu0 0.0
        %994 = vmatpush.msra.mxu0 0.0
        %995 = vmatpush.msra.mxu0 0.0
        %996 = vmatpush.msra.mxu0 0.0
        %997 = vmatpush.msra.mxu0 0.0
        %998 = vmatpush.msra.mxu0 0.0
        %999 = vmatpush.msra.mxu0 0.0
        %1000 = vmatpush.msra.mxu0 0.0
        %1001 = vmatpush.msra.mxu0 0.0
        %1002 = vmatpush.msra.mxu0 0.0
        %1003 = vmatpush.msra.mxu0 0.0
        %1004 = vmatpush.msra.mxu0 0.0
        %1005 = vmatpush.msra.mxu0 0.0
        %1006 = vmatpush.msra.mxu0 %v987
        %1007 = vmatmul.f32.gmra.mxu0 %v989
        %v1008 = vpop.f32.mrf.mxu0
        %v1009 = vadd.f32 0.0, %v1008
        %1010 = vdwg.mxu0
        %1012 = vset.pattern.permute.xlu0 0
        %1013 = vperm.xlu0 %1012, %v967
        %v1014 = vpop.permute.xlu0 %1013
        %v1016 = vadd.f32 %v1014, %v1009
        %v1017 = vxor.u32 %v1016, 2147483648
        %v1018 = vmul.f32 %v1017, 1.442695
        %v1019 = vpow.pop %v1018
        %v1020 = vadd.f32 %v1019, 1.0
        %v1021 = vrcp.pop %v1020
        %v1022 = vmul.f32 %v1020, %v1021
        %v1023 = vsub.f32 1.0, %v1022
        %v1024 = vmul.f32 %v1021, %v1023
        %v1025 = vadd.f32 %v1021, %v1024
        %vm1026 = vweird.f32 %v1020
        %vm1027 = vweird.f32 %v1021
        %vm1028 = vmor %vm1026, %vm1027
        %v1029 = vsel %vm1028, %v1021, %v1025
        %v1030 = vand.u32 2147483647, %v1020
        %vm1031 = vcmp.eq.f32.partialorder %v1030, 8.507059e+37
        %v1032 = vand.u32 %v1020, 2147483648
        %v1033 = vor.u32 1.1754944e-38, %v1032
        %v1034 = vsel %vm1031, %v1033, %v1029
        %v1035 = vmul.f32 1.0, %v1034
        %v1036 = vmul.f32 %v959, %v1035
        %v1037 = vmul.f32 %v962, %v1035
        %v1038 = vmul.f32 %v965, %v1035
        %v1039 = vmax.f32 %v928, 0.0
        %v1040 = vld [vmem:[%s0 + $0x128] sm:$0xff]
        %v1041 = vld [vmem:[%s0 + $0x130] sm:$0xff]
        %v1042 = vld [vmem:[%s0 + $0x138] sm:$0xff]
        %v1044 = vsel %vm290, %v1040, 0
        %v1047 = vsel %vm290, %v1041, 0
        %v1050 = vsel %vm290, %v1042, 0
        %1052 = vmatpush.msra.mxu0 0.0
        %1053 = vmatpush.msra.mxu0 0.0
        %1054 = vmatpush.msra.mxu0 0.0
        %1055 = vmatpush.msra.mxu0 0.0
        %1056 = vmatpush.msra.mxu0 0.0
        %1057 = vmatpush.msra.mxu0 0.0
        %1058 = vmatpush.msra.mxu0 0.0
        %1059 = vmatpush.msra.mxu0 0.0
        %1060 = vmatpush.msra.mxu0 0.0
        %1061 = vmatpush.msra.mxu0 0.0
        %1062 = vmatpush.msra.mxu0 0.0
        %1063 = vmatpush.msra.mxu0 0.0
        %1064 = vmatpush.msra.mxu0 0.0
        %1065 = vmatpush.msra.mxu0 %v1038
        %1066 = vmatpush.msra.mxu0 %v1037
        %1067 = vmatpush.msra.mxu0 %v1036
        %1068 = vmatmul.f32.gmra.mxu0 %v1044
        %v1069 = vpop.f32.mrf.mxu0
        %v1070 = vadd.f32 0.0, %v1069
        %1071 = vmatmul.f32.gmra.mxu0 %v1047
        %v1072 = vpop.f32.mrf.mxu0
        %v1073 = vadd.f32 0.0, %v1072
        %1074 = vmatmul.f32.gmra.mxu0 %v1050
        %v1075 = vpop.f32.mrf.mxu0
        %v1076 = vadd.f32 0.0, %v1075
        %1077 = vdwg.mxu0
        %v1078 = vmul.f32 %v1070, %v1070
        %v1079 = vmul.f32 %v1073, %v1073
        %v1080 = vadd.f32 %v1078, %v1079
        %v1081 = vmul.f32 %v1076, %v1076
        %v1082 = vadd.f32 %v1080, %v1081
        %v1083 = vmax.f32 %v1082, 1e-05
        %v1084 = vrsqrt.pop %v1083
        %v1085 = vmul.f32 %v1084, %v1083
        %v1086 = vmul.f32 %v1085, %v1084
        %v1087 = vmul.f32 0.5, %v1086
        %v1088 = vsub.f32 1.5, %v1087
        %v1089 = vmul.f32 %v1084, %v1088
        %v1090 = vmul.f32 %v1083, %v1089
        %vm1091 = vcmp.eq.f32.partialorder %v1083, inf
        %v1092 = vsel %vm1091, %v1083, %v1090
        %vm1093 = vcmp.eq.f32.partialorder %v1083, 0.0
        %v1094 = vand.u32 %v1083, 2147483648
        %v1095 = vsel %vm1093, %v1094, %v1092
        %v1096 = vld [vmem:[%s0 + $0x150] sm:$0xff]
        %v1097 = vld [vmem:[%s0 + $0x140] sm:$0xff]
        %v1099 = vsel %vm346, %v1097, 0
        %1101 = vmatpush.msra.mxu0 0.0
        %1102 = vmatpush.msra.mxu0 0.0
        %1103 = vmatpush.msra.mxu0 0.0
        %1104 = vmatpush.msra.mxu0 0.0
        %1105 = vmatpush.msra.mxu0 0.0
        %1106 = vmatpush.msra.mxu0 0.0
        %1107 = vmatpush.msra.mxu0 0.0
        %1108 = vmatpush.msra.mxu0 0.0
        %1109 = vmatpush.msra.mxu0 0.0
        %1110 = vmatpush.msra.mxu0 0.0
        %1111 = vmatpush.msra.mxu0 0.0
        %1112 = vmatpush.msra.mxu0 0.0
        %1113 = vmatpush.msra.mxu0 0.0
        %1114 = vmatpush.msra.mxu0 0.0
        %1115 = vmatpush.msra.mxu0 0.0
        %1116 = vmatpush.msra.mxu0 %v1039
        %1117 = vmatmul.f32.gmra.mxu0 %v1099
        %v1118 = vpop.f32.mrf.mxu0
        %v1119 = vadd.f32 0.0, %v1118
        %1120 = vdwg.mxu0
        %1122 = vset.pattern.permute.xlu0 0
        %1123 = vperm.xlu0 %1122, %v1096
        %v1124 = vpop.permute.xlu0 %1123
        %v1126 = vadd.f32 %v1124, %v1119
        %v1127 = vld [vmem:[%s0 + $0x148] sm:$0xff]
        %v1129 = vsel %vm346, %v1127, 0
        %1131 = vmatpush.msra.mxu0 0.0
        %1132 = vmatpush.msra.mxu0 0.0
        %1133 = vmatpush.msra.mxu0 0.0
        %1134 = vmatpush.msra.mxu0 0.0
        %1135 = vmatpush.msra.mxu0 0.0
        %1136 = vmatpush.msra.mxu0 0.0
        %1137 = vmatpush.msra.mxu0 0.0
        %1138 = vmatpush.msra.mxu0 0.0
        %1139 = vmatpush.msra.mxu0 0.0
        %1140 = vmatpush.msra.mxu0 0.0
        %1141 = vmatpush.msra.mxu0 0.0
        %1142 = vmatpush.msra.mxu0 0.0
        %1143 = vmatpush.msra.mxu0 0.0
        %1144 = vmatpush.msra.mxu0 0.0
        %1145 = vmatpush.msra.mxu0 0.0
        %1146 = vmatpush.msra.mxu0 %v1095
        %1147 = vmatmul.f32.gmra.mxu0 %v1129
        %v1148 = vpop.f32.mrf.mxu0
        %v1149 = vadd.f32 0.0, %v1148
        %1150 = vdwg.mxu0
        %v1151 = vadd.f32 %v1126, %v1149
        %v1152 = vld [vmem:[%s0 + $0x158] sm:$0xff]
        %v1153 = vld [vmem:[%s0 + $0x160] sm:$0xff]
        %v1154 = vld [vmem:[%s0 + $0x168] sm:$0xff]
        %v1156 = vsel %vm290, %v1152, 0
        %v1159 = vsel %vm290, %v1153, 0
        %v1162 = vsel %vm290, %v1154, 0
        %1164 = vmatpush.msra.mxu0 0.0
        %1165 = vmatpush.msra.mxu0 0.0
        %1166 = vmatpush.msra.mxu0 0.0
        %1167 = vmatpush.msra.mxu0 0.0
        %1168 = vmatpush.msra.mxu0 0.0
        %1169 = vmatpush.msra.mxu0 0.0
        %1170 = vmatpush.msra.mxu0 0.0
        %1171 = vmatpush.msra.mxu0 0.0
        %1172 = vmatpush.msra.mxu0 0.0
        %1173 = vmatpush.msra.mxu0 0.0
        %1174 = vmatpush.msra.mxu0 0.0
        %1175 = vmatpush.msra.mxu0 0.0
        %1176 = vmatpush.msra.mxu0 0.0
        %1177 = vmatpush.msra.mxu0 %v1076
        %1178 = vmatpush.msra.mxu0 %v1073
        %1179 = vmatpush.msra.mxu0 %v1070
        %1180 = vmatmul.f32.gmra.mxu0 %v1156
        %v1181 = vpop.f32.mrf.mxu0
        %v1182 = vadd.f32 0.0, %v1181
        %1183 = vmatmul.f32.gmra.mxu0 %v1159
        %v1184 = vpop.f32.mrf.mxu0
        %v1185 = vadd.f32 0.0, %v1184
        %1186 = vmatmul.f32.gmra.mxu0 %v1162
        %v1187 = vpop.f32.mrf.mxu0
        %v1188 = vadd.f32 0.0, %v1187
        %1189 = vdwg.mxu0
        %v1190 = vld [vmem:[%s0 + $0x178] sm:$0xff]
        %v1191 = vld [vmem:[%s0 + $0x170] sm:$0xff]
        %v1192 = vxor.u32 %v1151, 2147483648
        %v1193 = vmul.f32 %v1192, 1.442695
        %v1194 = vpow.pop %v1193
        %v1195 = vadd.f32 %v1194, 1.0
        %v1196 = vrcp.pop %v1195
        %v1197 = vmul.f32 %v1195, %v1196
        %v1198 = vsub.f32 1.0, %v1197
        %v1199 = vmul.f32 %v1196, %v1198
        %v1200 = vadd.f32 %v1196, %v1199
        %vm1201 = vweird.f32 %v1195
        %vm1202 = vweird.f32 %v1196
        %vm1203 = vmor %vm1201, %vm1202
        %v1204 = vsel %vm1203, %v1196, %v1200
        %v1205 = vand.u32 2147483647, %v1195
        %vm1206 = vcmp.eq.f32.partialorder %v1205, 8.507059e+37
        %v1207 = vand.u32 %v1195, 2147483648
        %v1208 = vor.u32 1.1754944e-38, %v1207
        %v1209 = vsel %vm1206, %v1208, %v1204
        %v1210 = vmul.f32 1.0, %v1209
        %v1212 = vsel %vm346, %v1191, 0
        %1214 = vmatpush.msra.mxu0 0.0
        %1215 = vmatpush.msra.mxu0 0.0
        %1216 = vmatpush.msra.mxu0 0.0
        %1217 = vmatpush.msra.mxu0 0.0
        %1218 = vmatpush.msra.mxu0 0.0
        %1219 = vmatpush.msra.mxu0 0.0
        %1220 = vmatpush.msra.mxu0 0.0
        %1221 = vmatpush.msra.mxu0 0.0
        %1222 = vmatpush.msra.mxu0 0.0
        %1223 = vmatpush.msra.mxu0 0.0
        %1224 = vmatpush.msra.mxu0 0.0
        %1225 = vmatpush.msra.mxu0 0.0
        %1226 = vmatpush.msra.mxu0 0.0
        %1227 = vmatpush.msra.mxu0 0.0
        %1228 = vmatpush.msra.mxu0 0.0
        %1229 = vmatpush.msra.mxu0 %v1210
        %1230 = vmatmul.f32.gmra.mxu0 %v1212
        %v1231 = vpop.f32.mrf.mxu0
        %v1232 = vadd.f32 0.0, %v1231
        %1233 = vdwg.mxu0
        %1235 = vset.pattern.permute.xlu0 0
        %1236 = vperm.xlu0 %1235, %v1190
        %v1237 = vpop.permute.xlu0 %1236
        %v1239 = vadd.f32 %v1237, %v1232
        %v1240 = vxor.u32 %v1239, 2147483648
        %v1241 = vmul.f32 %v1240, 1.442695
        %v1242 = vpow.pop %v1241
        %v1243 = vadd.f32 %v1242, 1.0
        %v1244 = vrcp.pop %v1243
        %v1245 = vmul.f32 %v1243, %v1244
        %v1246 = vsub.f32 1.0, %v1245
        %v1247 = vmul.f32 %v1244, %v1246
        %v1248 = vadd.f32 %v1244, %v1247
        %vm1249 = vweird.f32 %v1243
        %vm1250 = vweird.f32 %v1244
        %vm1251 = vmor %vm1249, %vm1250
        %v1252 = vsel %vm1251, %v1244, %v1248
        %v1253 = vand.u32 2147483647, %v1243
        %vm1254 = vcmp.eq.f32.partialorder %v1253, 8.507059e+37
        %v1255 = vand.u32 %v1243, 2147483648
        %v1256 = vor.u32 1.1754944e-38, %v1255
        %v1257 = vsel %vm1254, %v1256, %v1252
        %v1258 = vmul.f32 1.0, %v1257
        %v1259 = vmul.f32 %v1182, %v1258
        %v1260 = vmul.f32 %v1185, %v1258
        %v1261 = vmul.f32 %v1188, %v1258
        %1262 = vst [vmem:[%s278] sm:$0xff] %v1151
        %1263 = vst [vmem:[%s278 + $0x8] sm:$0xff] %v1259
        %1264 = vst [vmem:[%s278 + $0x10] sm:$0xff] %v1260
        %1265 = vst [vmem:[%s278 + $0x18] sm:$0xff] %v1261
        %s1266 = sand.u32 %s95, 1
        %s1267 = sand.u32 %s95, 1
        %s1268 = smul.addr %s1267, 32
        %s1269 = scalar_lea.vmem [#allocation4], %s1268
        // Predicated region
        $region109: #{bond_ffn_gvp.1} parent=99 // pred_check
          %p1270 = pneg %p105
        $region110: #{bond_ffn_gvp.1} parent=99 // pred_check_branch
          %1272 = sbr.rel (%p1270) target = $region112
        $region111: #{bond_ffn_gvp.1} parent=99 // pred_region
          %s1273 = smul.addr %s14, 8
          %s1274 = scalar_lea.vmem %s3, %s1273
          // Predicated region
          $region113: #{bond_ffn_gvp.1} parent=111 // pred_check
            _
          $region114: #{bond_ffn_gvp.1} parent=111 // pred_check_branch
            %1276 = sbr.rel (0) target = $region116
          $region115: #{bond_ffn_gvp.1} parent=111 // pred_region
            // Predicated region
            $region117: #{bond_ffn_gvp.1} parent=115 // pred_check
              _
            $region118: #{bond_ffn_gvp.1} parent=115 // pred_check_branch
              %1278 = sbr.rel (0) target = $region120
            $region119: #{bond_ffn_gvp.1} parent=115 // pred_region
              // Predicated region
              $region132: #{bond_ffn_gvp.1} parent=119 // pred_check
                _
              $region133: #{bond_ffn_gvp.1} parent=119 // pred_check_branch
                %1300 = sbr.rel (0) target = $region135
              $region134: #{bond_ffn_gvp.1} parent=119 // pred_region
                loop: start=0, step=1, limit=1
                $region136: #{bond_ffn_gvp.1} parent=134 // loop_pre_header
                  _
                $region137: #{bond_ffn_gvp.1} parent=134 // loop_header
                  %s1302 = sphi 0, %s1306
                  %p1303 = scmp.ge.s32.totalorder %s1302, 1
                  %s1307 = sphi %s1269, %s1269
                  %s1308 = sphi %s1274, %s1274
                $region138: #{bond_ffn_gvp.1} parent=134 // loop_header_branch
                  %1305 = sbr.rel (%p1303) target = $region142
                $region139: #{bond_ffn_gvp.1} parent=134 // loop_body
                  %v1309 = vld [vmem:[%s1307] sm:$0xff]
                  %1310 = vst [vmem:[%s1308] sm:$0xff] %v1309
                  %v1311 = vld [vmem:[%s1307 + $0x8] sm:$0xff]
                  %1312 = vst [vmem:[%s1308 + $0x20] sm:$0xff] %v1311
                  %v1313 = vld [vmem:[%s1307 + $0x10] sm:$0xff]
                  %1314 = vst [vmem:[%s1308 + $0x40] sm:$0xff] %v1313
                  %v1315 = vld [vmem:[%s1307 + $0x18] sm:$0xff]
                  %1316 = vst [vmem:[%s1308 + $0x60] sm:$0xff] %v1315
                $region140: #{bond_ffn_gvp.1} parent=134 // loop_footer
                  %s1306 = sadd.s32 1, %s1302
                $region141: #{bond_ffn_gvp.1} parent=134 // loop_footer_branch
                  %1301 = sbr.rel target = $region137
                $region142: #{bond_ffn_gvp.1} parent=134 // loop_exit
                  _
              $region135: #{bond_ffn_gvp.1} parent=119 // pred_fallthru
                _
              // Predicated region
              $region143: #{bond_ffn_gvp.1} parent=119 // pred_check
                _
              $region144: #{bond_ffn_gvp.1} parent=119 // pred_check_branch
                %1318 = sbr.rel target = $region146
              $region145: #{bond_ffn_gvp.1} parent=119 // pred_region
                _
              $region146: #{bond_ffn_gvp.1} parent=119 // pred_fallthru
                _
            $region120: #{bond_ffn_gvp.1} parent=115 // pred_fallthru
              _
            // Predicated region
            $region121: #{bond_ffn_gvp.1} parent=115 // pred_check
              _
            $region122: #{bond_ffn_gvp.1} parent=115 // pred_check_branch
              %1280 = sbr.rel target = $region124
            $region123: #{bond_ffn_gvp.1} parent=115 // pred_region
              %s1282 = ssub.s32 256, 1
              loop: start=0, step=1, limit=1
              $region125: #{bond_ffn_gvp.1} parent=123 // loop_pre_header
                _
              $region126: #{bond_ffn_gvp.1} parent=123 // loop_header
                %s1284 = sphi 0, %s1288
                %p1285 = scmp.ge.s32.totalorder %s1284, 1
                %s1289 = sphi %s1269, %s1269
                %s1290 = sphi %s1274, %s1274
              $region127: #{bond_ffn_gvp.1} parent=123 // loop_header_branch
                %1287 = sbr.rel (%p1285) target = $region131
              $region128: #{bond_ffn_gvp.1} parent=123 // loop_body
                %v1291 = vld [vmem:[%s1289] sm:%s1282]
                %1292 = vst [vmem:[%s1290] sm:%s1282] %v1291
                %v1293 = vld [vmem:[%s1289 + $0x8] sm:%s1282]
                %1294 = vst [vmem:[%s1290 + $0x20] sm:%s1282] %v1293
                %v1295 = vld [vmem:[%s1289 + $0x10] sm:%s1282]
                %1296 = vst [vmem:[%s1290 + $0x40] sm:%s1282] %v1295
                %v1297 = vld [vmem:[%s1289 + $0x18] sm:%s1282]
                %1298 = vst [vmem:[%s1290 + $0x60] sm:%s1282] %v1297
              $region129: #{bond_ffn_gvp.1} parent=123 // loop_footer
                %s1288 = sadd.s32 1, %s1284
              $region130: #{bond_ffn_gvp.1} parent=123 // loop_footer_branch
                %1283 = sbr.rel target = $region126
              $region131: #{bond_ffn_gvp.1} parent=123 // loop_exit
                _
            $region124: #{bond_ffn_gvp.1} parent=115 // pred_fallthru
              _
          $region116: #{bond_ffn_gvp.1} parent=111 // pred_fallthru
            _
          %1319 = vnop
        $region112: #{bond_ffn_gvp.1} parent=99 // pred_fallthru
          _
      $region100: #{bond_ffn_gvp.1} parent=5 // pred_fallthru
        _
      %p1320 = scmp.le.s32.totalorder 2, %s9
      // Predicated region
      $region147: #{bond_ffn_gvp.1} parent=5 // pred_check
        %p1321 = pneg %p1320
      $region148: #{bond_ffn_gvp.1} parent=5 // pred_check_branch
        %1323 = sbr.rel (%p1321) target = $region150
      $region149: #{bond_ffn_gvp.1} parent=5 // pred_region
        %s1324 = ssub.s32 %s9, 2
        // Predicated region
        $region151: #{bond_ffn_gvp.1} parent=149 // pred_check
          %p1325 = pneg %p111
        $region152: #{bond_ffn_gvp.1} parent=149 // pred_check_branch
          %1327 = sbr.rel (%p1325) target = $region154
        $region153: #{bond_ffn_gvp.1} parent=149 // pred_region
          %s1328 = sand.u32 %s96, 1
          %s1329 = sand.u32 %s96, 1
          %s1330 = smul.addr %s1329, 32
          %s1331 = scalar_lea.vmem [#allocation4], %s1330
        $region154: #{bond_ffn_gvp.1} parent=149 // pred_fallthru
          _
      $region150: #{bond_ffn_gvp.1} parent=5 // pred_fallthru
        _
    $region6: #{bond_ffn_gvp.1} parent=1 // loop_footer
      %s13 = sadd.s32 1, %s9
    $region7: #{bond_ffn_gvp.1} parent=1 // loop_footer_branch
      %8 = sbr.rel target = $region3
    $region8: #{bond_ffn_gvp.1} parent=1 // loop_exit
      _

</llo_original>
